<compile_context>
chip_gen: v5e
topology: v5e:2x2
jax: 0.10.0
libtpu: 0.0.40
codegen_flags: <defaults>
</compile_context>

<pallas_src>
import functools

import jax
import jax.numpy as jnp
from jax.experimental import pallas as pl
from jax.experimental.pallas import tpu as pltpu


def _round_up(v, m):
    return (v + m - 1) // m * m


# ----------------------------- the Pallas kernel -----------------------------
def gated_actor_critic_kernel(xq_ref, xkv_ref, h0_ref, wq_ref, wkv_ref, wo_ref,
                              w2d_ref, b_ref, out_ref, aw_ref, h_scr, *,
                              n_heads, hidden, out_dim):
    t_idx = pl.program_id(1)                       # timestep ("arbitrary" axis)
    TN, D = xq_ref.shape                           # query-row block
    N = xkv_ref.shape[0]                           # all rows (keys / values)
    H = hidden
    dh = D // n_heads
    lv_w = _round_up(out_dim + 1, 8)
    scale = 1.0 / float(dh) ** 0.5
    f32, bf16 = jnp.float32, jnp.bfloat16

    # recurrent hidden state lives in VMEM for the whole T sweep of this block
    @pl.when(t_idx == 0)
    def _():
        h_scr[...] = h0_ref[...]

    xq = xq_ref[...]                               # (TN, D) bf16
    xkv = xkv_ref[...]                             # (N,  D) bf16
    h_in = h_scr[...]                              # (TN, H) f32

    # ---- multi-head self-attention, batched over the head axis --------------
    bq = b_ref[0:n_heads, 0:dh]                    # (heads, dh)
    bkv = b_ref[0:n_heads, dh:3 * dh]              # (heads, 2*dh)
    xq_b = jnp.broadcast_to(xq[None, :, :], (n_heads, TN, D))
    xkv_b = jnp.broadcast_to(xkv[None, :, :], (n_heads, N, D))
    q = jnp.einsum("hnd,hde->hne", xq_b, wq_ref[...],
                   preferred_element_type=f32) + bq[:, None, :]       # (h,TN,dh)
    kv = jnp.einsum("hnd,hde->hne", xkv_b, wkv_ref[...],
                    preferred_element_type=f32) + bkv[:, None, :]     # (h,N,2dh)
    k = kv[:, :, 0:dh]
    v = kv[:, :, dh:2 * dh]

    s = jnp.einsum("hqe,hke->hqk", q.astype(bf16), k.astype(bf16),
                   preferred_element_type=f32) * scale                # (h,TN,N)
    s = s - jnp.max(s, axis=-1, keepdims=True)
    e = jnp.exp(s)
    p = e / jnp.sum(e, axis=-1, keepdims=True)     # exact: attn_w is an output

    o_h = jnp.einsum("hqk,hke->hqe", p.astype(bf16), v.astype(bf16),
                     preferred_element_type=f32)                      # (h,TN,dh)
    bo = b_ref[n_heads:n_heads + 1, 0:D]
    # sum over heads of (o_h @ Wo_h)  ==  concat(heads) @ Wo  (no lane concat)
    attn = jnp.sum(jnp.einsum("hqe,hef->hqf", o_h.astype(bf16), wo_ref[...],
                              preferred_element_type=f32), axis=0) + bo

    # ---- GRUCell: h_out = GRU(attn, h_in)  (PyTorch gate order r, z, n) ------
    wih = w2d_ref[0:D, 0:3 * H]
    whh = w2d_ref[D:D + H, 0:3 * H]
    bih = b_ref[n_heads + 1:n_heads + 2, 0:3 * H]
    bhh = b_ref[n_heads + 2:n_heads + 3, 0:3 * H]
    gx = jnp.dot(attn.astype(bf16), wih, preferred_element_type=f32) + bih
    gh = jnp.dot(h_in.astype(bf16), whh, preferred_element_type=f32) + bhh
    rz = jax.nn.sigmoid(gx[:, 0:2 * H] + gh[:, 0:2 * H])              # fused r,z
    r = rz[:, 0:H]
    z = rz[:, H:2 * H]
    n_gate = jnp.tanh(gx[:, 2 * H:3 * H] + r * gh[:, 2 * H:3 * H])
    h_out = (1.0 - z) * n_gate + z * h_in                             # (TN, H)
    h_scr[...] = h_out                             # carry to the next timestep

    # ---- MLP trunk + fused actor / critic towers -----------------------------
    wlin = w2d_ref[D + H:D + 2 * H, 0:H]
    wac1 = w2d_ref[D + 2 * H:D + 3 * H, 0:2 * H]
    wac2 = w2d_ref[D + 3 * H:D + 5 * H, 0:2 * H]
    wac3 = w2d_ref[D + 5 * H:D + 7 * H, 0:lv_w]
    blin = b_ref[n_heads + 3:n_heads + 4, 0:H]
    bac1 = b_ref[n_heads + 4:n_heads + 5, 0:2 * H]
    bac2 = b_ref[n_heads + 5:n_heads + 6, 0:2 * H]
    bac3 = b_ref[n_heads + 6:n_heads + 7, 0:lv_w]

    xh = jax.nn.relu(jnp.dot(h_out.astype(bf16), wlin,
                             preferred_element_type=f32) + blin)
    t1 = jax.nn.relu(jnp.dot(xh.astype(bf16), wac1,
                             preferred_element_type=f32) + bac1)      # (TN, 2H)
    t2 = jax.nn.relu(jnp.dot(t1.astype(bf16), wac2,
                             preferred_element_type=f32) + bac2)      # (TN, 2H)
    lv = jnp.dot(t2.astype(bf16), wac3, preferred_element_type=f32) + bac3

    # ---- outputs: aligned lane-dense slab + separate attention weights ------
    pad = out_ref.shape[1] - (H + lv_w)            # pieces at lanes 0, H, H+lv_w
    parts = [h_out, lv]
    if pad:
        parts.append(jnp.zeros((TN, pad), f32))
    out_ref[...] = jnp.concatenate(parts, axis=-1)
    aw_ref[...] = p


# ------------------------- host-side parameter packing -----------------------
def pack_params(params, *, n_heads, d, hidden, out_dim):
    (wq, bq, wk, bk, wv, bv, wo, bo,
     wih, bih, whh, bhh,
     wlin, blin, wah, bah, wah2, bah2, wa, ba,
     wch, bch, wch2, bch2, wc, bc) = params
    H = hidden
    assert d % n_heads == 0
    dh = d // n_heads
    lv_w = _round_up(out_dim + 1, 8)

    def heads_of(w):                      # (d, d) -> (heads, d, dh)
        return w.reshape(d, n_heads, dh).transpose(1, 0, 2)

    # per-head projections (q separate from k|v so the kernel can tile q rows)
    wq_h = heads_of(wq)                                                # (h, d, dh)
    wkv_h = jnp.concatenate([heads_of(wk), heads_of(wv)], axis=-1)     # (h, d, 2dh)
    wo_h = wo.reshape(n_heads, dh, d)                                  # (h, dh, d)
    bq_h = bq.reshape(n_heads, dh)
    bkv_h = jnp.concatenate([bk.reshape(n_heads, dh),
                             bv.reshape(n_heads, dh)], axis=-1)        # (h, 2dh)

    # fused actor/critic tower weights (logit|value block padded to 8 lanes)
    wac1 = jnp.concatenate([wah, wch], axis=-1)                        # (H, 2H)
    wac2 = jnp.zeros((2 * H, 2 * H), jnp.float32)
    wac2 = wac2.at[:H, :H].set(wah2).at[H:, H:].set(wch2)              # blockdiag
    wac3 = jnp.zeros((2 * H, lv_w), jnp.float32)
    wac3 = wac3.at[:H, :out_dim].set(wa).at[H:, out_dim:out_dim + 1].set(wc)
    bac1 = jnp.concatenate([bah, bch], axis=-1)
    bac2 = jnp.concatenate([bah2, bch2], axis=-1)
    bac3 = jnp.zeros((1, lv_w), jnp.float32)
    bac3 = bac3.at[:, :out_dim].set(ba).at[:, out_dim:out_dim + 1].set(bc)

    # single 2-D weight slab (rows: wih, whh, wlin, wac1, wac2, wac3)
    W = 3 * H
    def padw(w):
        return jnp.pad(w, ((0, 0), (0, W - w.shape[1])))
    w2d = jnp.concatenate([padw(wih), padw(whh), padw(wlin),
                           padw(wac1), padw(wac2), padw(wac3)], axis=0)

    # single bias slab, lane-dense width, kept in f32 (added post-accumulation)
    bw = _round_up(max(3 * H, d, 2 * H, lv_w, 3 * dh), 128)
    def padb(b):
        return jnp.pad(b, ((0, 0), (0, bw - b.shape[1])))
    bqkv_row = jnp.concatenate([bq_h, bkv_h], axis=-1)                 # (h, 3dh)
    b_slab = jnp.concatenate([padb(bqkv_row), padb(bo), padb(bih), padb(bhh),
                              padb(blin), padb(bac1), padb(bac2), padb(bac3)],
                             axis=0)

    bf = jnp.bfloat16
    return (wq_h.astype(bf), wkv_h.astype(bf), wo_h.astype(bf),
            w2d.astype(bf), b_slab.astype(jnp.float32))


# --------------------------------- wrappers -----------------------------------
def gated_actor_critic_rollout(xs, h0, packed, *, n_heads, output_size,
                               tile_rows=None):
    """Runs T recurrent steps of GatedActorCritic.forward in one pallas_call."""
    T, N, D = xs.shape
    H = h0.shape[-1]
    TN = tile_rows if tile_rows is not None else min(N, 128)
    assert N % TN == 0, "row count must be a multiple of the row tile"
    R = N // TN
    wq_h, wkv_h, wo_h, w2d, b_slab = packed
    dh = D // n_heads
    lv_w = _round_up(output_size + 1, 8)
    SW = _round_up(H + lv_w, 128)                   # lane-dense output slab

    xs_bf = xs.astype(jnp.bfloat16)                 # MXU inputs (halves x DMA)

    # VMEM budget: resident weight slabs + double-buffered per-step blocks.
    weight_bytes = sum(a.size * a.dtype.itemsize
                       for a in (wq_h, wkv_h, wo_h, w2d, b_slab))
    block_bytes = (2 * (TN + N) * D * 2                       # x blocks (bf16)
                   + 2 * (TN * SW + n_heads * TN * N) * 4     # output blocks
                   + (TN + N) * H * 4)                        # h scratch + h0
    vmem_limit = int(max(16 * 2 ** 20,
                         min(64 * 2 ** 20, 6 * (weight_bytes + block_bytes))))

    kernel = functools.partial(gated_actor_critic_kernel, n_heads=n_heads,
                               hidden=H, out_dim=output_size)
    out_slab, attn_w = pl.pallas_call(
        kernel,
        grid=(R, T),
        in_specs=[
            pl.BlockSpec((None, TN, D), lambda r, t: (t, r, 0)),        # x (queries)
            pl.BlockSpec((None, N, D), lambda r, t: (t, 0, 0)),         # x (keys/vals)
            pl.BlockSpec((TN, H), lambda r, t: (r, 0)),                 # h0
            pl.BlockSpec((n_heads, D, dh), lambda r, t: (0, 0, 0)),     # Wq  (resident)
            pl.BlockSpec((n_heads, D, 2 * dh), lambda r, t: (0, 0, 0)), # Wkv (resident)
            pl.BlockSpec((n_heads, dh, D), lambda r, t: (0, 0, 0)),     # Wo  (resident)
            pl.BlockSpec(w2d.shape, lambda r, t: (0, 0)),               # GRU+MLP slab
            pl.BlockSpec(b_slab.shape, lambda r, t: (0, 0)),            # bias slab
        ],
        out_specs=[
            pl.BlockSpec((None, TN, SW), lambda r, t: (t, r, 0)),
            pl.BlockSpec((None, n_heads, TN, N), lambda r, t: (t, 0, r, 0)),
        ],
        out_shape=[
            jax.ShapeDtypeStruct((T, N, SW), jnp.float32),
            jax.ShapeDtypeStruct((T, n_heads, N, N), jnp.float32),
        ],
        scratch_shapes=[pltpu.VMEM((TN, H), jnp.float32)],              # h carry
        compiler_params=pltpu.CompilerParams(
            dimension_semantics=("parallel", "arbitrary"),
            vmem_limit_bytes=vmem_limit),
    )(xs_bf, xs_bf, h0, wq_h, wkv_h, wo_h, w2d, b_slab)

    h_out = out_slab[:, :, 0:H]
    logit = out_slab[:, :, H:H + output_size]
    value = out_slab[:, :, H + output_size:H + output_size + 1]
    return logit, value, h_out, attn_w


def gated_actor_critic(x, h_in, packed, *, n_heads, output_size):
    """Single-step forward(x, h_in) of the PyTorch module (T == 1 rollout)."""
    logit, value, h_out, attn_w = gated_actor_critic_rollout(
        x[None], h_in, packed, n_heads=n_heads, output_size=output_size)
    return logit[0], value[0], h_out[0], attn_w[0]


# ------------------------- deterministic parameter init ----------------------
def _kaiming_linear(key, fan_in, fan_out):
    # torch.nn.init.kaiming_normal_ default (fan_in, gain=sqrt(2)); bias = 0.01
    w = jax.random.normal(key, (fan_out, fan_in), jnp.float32) * jnp.sqrt(2.0 / fan_in)
    b = jnp.full((1, fan_out), 0.01, jnp.float32)
    return w.T, b  # pass transposed (in, out)


def _gru_params(key, d_in, hidden):
    k = 1.0 / jnp.sqrt(jnp.float32(hidden))
    k1, k2, k3, k4 = jax.random.split(key, 4)
    w_ih = jax.random.uniform(k1, (3 * hidden, d_in), jnp.float32, -k, k).T
    b_ih = jax.random.uniform(k2, (1, 3 * hidden), jnp.float32, -k, k)
    w_hh = jax.random.uniform(k3, (3 * hidden, hidden), jnp.float32, -k, k).T
    b_hh = jax.random.uniform(k4, (1, 3 * hidden), jnp.float32, -k, k)
    return w_ih, b_ih, w_hh, b_hh


# ------------------------------ pure-JAX reference ----------------------------
def _reference_step(x, h_in, params, *, n_heads):
    (wq, bq, wk, bk, wv, bv, wo, bo,
     wih, bih, whh, bhh,
     wlin, blin, wah, bah, wah2, bah2, wa, ba,
     wch, bch, wch2, bch2, wc, bc) = params
    N, D = x.shape
    H = h_in.shape[-1]
    dh = D // n_heads
    q, k, v = x @ wq + bq, x @ wk + bk, x @ wv + bv
    outs, ws = [], []
    for hd in range(n_heads):
        sl = slice(hd * dh, (hd + 1) * dh)
        s = (q[:, sl] @ k[:, sl].T) / jnp.sqrt(jnp.float32(dh))
        p = jax.nn.softmax(s, axis=-1)
        ws.append(p)
        outs.append(p @ v[:, sl])
    attn = jnp.concatenate(outs, axis=-1) @ wo + bo
    gx, gh = attn @ wih + bih, h_in @ whh + bhh
    r = jax.nn.sigmoid(gx[:, :H] + gh[:, :H])
    z = jax.nn.sigmoid(gx[:, H:2 * H] + gh[:, H:2 * H])
    n = jnp.tanh(gx[:, 2 * H:] + r * gh[:, 2 * H:])
    h_out = (1 - z) * n + z * h_in
    xh = jax.nn.relu(h_out @ wlin + blin)
    ah = jax.nn.relu(jax.nn.relu(xh @ wah + bah) @ wah2 + bah2)
    ch = jax.nn.relu(jax.nn.relu(xh @ wch + bch) @ wch2 + bch2)
    return ah @ wa + ba, ch @ wc + bc, h_out, jnp.stack(ws, axis=0)


def _reference_rollout(xs, h0, params, *, n_heads):
    logits, values, hs, ws = [], [], [], []
    h = h0
    for t in range(xs.shape[0]):
        l, v, h, w = _reference_step(xs[t], h, params, n_heads=n_heads)
        logits.append(l); values.append(v); hs.append(h); ws.append(w)
    return (jnp.stack(logits), jnp.stack(values), jnp.stack(hs), jnp.stack(ws))


if __name__ == "__main__":
    T, N, D, HID, OUT, HEADS = 4, 8, 32, 32, 8, 4

    key = jax.random.PRNGKey(0)
    keys = jax.random.split(key, 16)

    xs = jax.random.normal(keys[0], (T, N, D), jnp.float32)
    h0 = jax.random.normal(keys[1], (N, HID), jnp.float32) * 0.1

    # MultiHeadAttention projections (D -> D)
    wq, bq = _kaiming_linear(keys[2], D, D)
    wk, bk = _kaiming_linear(keys[3], D, D)
    wv, bv = _kaiming_linear(keys[4], D, D)
    wo, bo = _kaiming_linear(keys[5], D, D)
    # GRUCell (input D, hidden HID)
    wih, bih, whh, bhh = _gru_params(keys[6], D, HID)
    # trunk / actor / critic
    wlin, blin = _kaiming_linear(keys[7], HID, HID)
    wah, bah = _kaiming_linear(keys[8], HID, HID)
    wah2, bah2 = _kaiming_linear(keys[9], HID, HID)
    wa, ba = _kaiming_linear(keys[10], HID, OUT)
    wch, bch = _kaiming_linear(keys[11], HID, HID)
    wch2, bch2 = _kaiming_linear(keys[12], HID, HID)
    wc, bc = _kaiming_linear(keys[13], HID, 1)

    params = (wq, bq, wk, bk, wv, bv, wo, bo,
              wih, bih, whh, bhh,
              wlin, blin, wah, bah, wah2, bah2, wa, ba,
              wch, bch, wch2, bch2, wc, bc)

    packed = pack_params(params, n_heads=HEADS, d=D, hidden=HID, out_dim=OUT)

    # Fused T-step rollout: one pallas_call, grid = (row_blocks, T)
    logit, value, h_out, attn_w = jax.block_until_ready(
        gated_actor_critic_rollout(xs, h0, packed, n_heads=HEADS,
                                   output_size=OUT))

    rl, rv, rh, rw = _reference_rollout(xs, h0, params, n_heads=HEADS)
    assert logit.shape == (T, N, OUT) and value.shape == (T, N, 1)
    assert h_out.shape == (T, N, HID) and attn_w.shape == (T, HEADS, N, N)
    # tolerance: bf16 MXU operands (f32 accumulation) across a T=4 recurrence
    tol = dict(rtol=5e-2, atol=5e-2)
    for got, ref in ((logit, rl), (value, rv), (h_out, rh), (attn_w, rw)):
        assert jnp.allclose(got, ref, **tol), "rollout mismatch vs reference"

    # Single-step module-equivalent forward (T == 1)
    l1, v1, h1, w1 = jax.block_until_ready(
        gated_actor_critic(xs[0], h0, packed, n_heads=HEADS, output_size=OUT))
    sl, sv, sh, sw = _reference_step(xs[0], h0, params, n_heads=HEADS)
    assert l1.shape == (N, OUT) and v1.shape == (N, 1)
    assert h1.shape == (N, HID) and w1.shape == (HEADS, N, N)
    for got, ref in ((l1, sl), (v1, sv), (h1, sh), (w1, sw)):
        assert jnp.allclose(got, ref, **tol), "single-step mismatch vs reference"

    print("KERNEL_OK")
</pallas_src>

<mosaic_0001>
module attributes {stable_mosaic.version = 11 : i64} {
  func.func @gated_actor_critic_kernel(%arg0: i32, %arg1: i32, %arg2: memref<1x8x32xbf16, #tpu.memory_space<vmem>>, %arg3: memref<1x8x32xbf16, #tpu.memory_space<vmem>>, %arg4: memref<8x32xf32, #tpu.memory_space<vmem>>, %arg5: memref<4x32x8xbf16, #tpu.memory_space<vmem>>, %arg6: memref<4x32x16xbf16, #tpu.memory_space<vmem>>, %arg7: memref<4x8x32xbf16, #tpu.memory_space<vmem>>, %arg8: memref<256x96xbf16, #tpu.memory_space<vmem>>, %arg9: memref<11x128xf32, #tpu.memory_space<vmem>>, %arg10: memref<1x8x128xf32, #tpu.memory_space<vmem>>, %arg11: memref<1x4x8x8xf32, #tpu.memory_space<vmem>>, %arg12: memref<8x32xf32, #tpu.memory_space<vmem>>) attributes {dimension_semantics = [#tpu.dimension_semantics<parallel>, #tpu.dimension_semantics<arbitrary>], iteration_bounds = array<i64: 1, 4>, scalar_prefetch = 0 : i64, scratch_operands = 1 : i64, tpu.core_type = #tpu.core_type<tc>, window_params = [{transform_indices = @transform_0, window_bounds = array<i64: 1, 8, 32>}, {transform_indices = @transform_1, window_bounds = array<i64: 1, 8, 32>}, {transform_indices = @transform_2, window_bounds = array<i64: 8, 32>}, {pipeline_mode = #tpu.pipeline_mode<synchronous>, transform_indices = @transform_3, window_bounds = array<i64: 4, 32, 8>}, {pipeline_mode = #tpu.pipeline_mode<synchronous>, transform_indices = @transform_4, window_bounds = array<i64: 4, 32, 16>}, {pipeline_mode = #tpu.pipeline_mode<synchronous>, transform_indices = @transform_5, window_bounds = array<i64: 4, 8, 32>}, {pipeline_mode = #tpu.pipeline_mode<synchronous>, transform_indices = @transform_6, window_bounds = array<i64: 256, 96>}, {pipeline_mode = #tpu.pipeline_mode<synchronous>, transform_indices = @transform_7, window_bounds = array<i64: 11, 128>}, {transform_indices = @transform_8, window_bounds = array<i64: 1, 8, 128>}, {transform_indices = @transform_9, window_bounds = array<i64: 1, 4, 8, 8>}]} {
    %c0_i32 = arith.constant 0 : i32
    %0 = arith.cmpi eq, %arg1, %c0_i32 : i32
    %1 = arith.extui %0 : i1 to i32
    %c0_i32_0 = arith.constant 0 : i32
    %2 = arith.cmpi ne, %1, %c0_i32_0 : i32
    scf.if %2 {
      %c0_64 = arith.constant 0 : index
      %c0_65 = arith.constant 0 : index
      %123 = vector.load %arg4[%c0_64, %c0_65] : memref<8x32xf32, #tpu.memory_space<vmem>>, vector<8x32xf32>
      %c0_66 = arith.constant 0 : index
      %c0_67 = arith.constant 0 : index
      %124 = vector.load %arg12[%c0_66, %c0_67] : memref<8x32xf32, #tpu.memory_space<vmem>>, vector<8x32xf32>
      tpu.vector_store %arg12[%c0_66, %c0_67], %123 {strides = array<i32>} : memref<8x32xf32, #tpu.memory_space<vmem>>, vector<8x32xf32>,
    } else {
    }
    %c0 = arith.constant 0 : index
    %c0_1 = arith.constant 0 : index
    %c0_2 = arith.constant 0 : index
    %3 = vector.load %arg2[%c0, %c0_1, %c0_2] : memref<1x8x32xbf16, #tpu.memory_space<vmem>>, vector<1x8x32xbf16>
    %4 = vector.shape_cast %3 : vector<1x8x32xbf16> to vector<8x32xbf16>
    %c0_3 = arith.constant 0 : index
    %c0_4 = arith.constant 0 : index
    %c0_5 = arith.constant 0 : index
    %5 = vector.load %arg3[%c0_3, %c0_4, %c0_5] : memref<1x8x32xbf16, #tpu.memory_space<vmem>>, vector<1x8x32xbf16>
    %6 = vector.shape_cast %5 : vector<1x8x32xbf16> to vector<8x32xbf16>
    %c0_6 = arith.constant 0 : index
    %c0_7 = arith.constant 0 : index
    %7 = vector.load %arg12[%c0_6, %c0_7] : memref<8x32xf32, #tpu.memory_space<vmem>>, vector<8x32xf32>
    %c0_8 = arith.constant 0 : index
    %c0_9 = arith.constant 0 : index
    %8 = vector.load %arg9[%c0_8, %c0_9] : memref<11x128xf32, #tpu.memory_space<vmem>>, vector<4x8xf32>
    %c0_10 = arith.constant 0 : index
    %c8 = arith.constant 8 : index
    %9 = vector.load %arg9[%c0_10, %c8] : memref<11x128xf32, #tpu.memory_space<vmem>>, vector<4x16xf32>
    %10 = vector.shape_cast %4 : vector<8x32xbf16> to vector<1x8x32xbf16>
    %11 = vector.shape_cast %10 : vector<1x8x32xbf16> to vector<1x8x32xbf16>
    %12 = vector.broadcast %11 : vector<1x8x32xbf16> to vector<4x8x32xbf16>
    %13 = vector.shape_cast %6 : vector<8x32xbf16> to vector<1x8x32xbf16>
    %14 = vector.shape_cast %13 : vector<1x8x32xbf16> to vector<1x8x32xbf16>
    %15 = vector.broadcast %14 : vector<1x8x32xbf16> to vector<4x8x32xbf16>
    %c0_11 = arith.constant 0 : index
    %c0_12 = arith.constant 0 : index
    %c0_13 = arith.constant 0 : index
    %16 = vector.load %arg5[%c0_11, %c0_12, %c0_13] : memref<4x32x8xbf16, #tpu.memory_space<vmem>>, vector<4x32x8xbf16>
    "tpu.trace_start"() <{level = 10 : i32, message = "hnd,hde->hne"}> : () -> ()
    %cst = arith.constant dense<0.000000e+00> : vector<4x8x8xf32>
    %17 = tpu.matmul %12, %16, %cst {dimension_numbers = #tpu.dot_dimension_numbers<[2], [1], [1], [2], [0, 0, 0, 1, 1, 2], [0], [0]>} : vector<4x8x32xbf16>, vector<4x32x8xbf16>, vector<4x8x8xf32> -> vector<4x8x8xf32>
    "tpu.trace_stop"() : () -> ()
    %18 = vector.shape_cast %8 : vector<4x8xf32> to vector<4x1x8xf32>
    %19 = vector.broadcast %18 : vector<4x1x8xf32> to vector<4x8x8xf32>
    %20 = arith.addf %17, %19 : vector<4x8x8xf32>
    %c0_14 = arith.constant 0 : index
    %c0_15 = arith.constant 0 : index
    %c0_16 = arith.constant 0 : index
    %21 = vector.load %arg6[%c0_14, %c0_15, %c0_16] : memref<4x32x16xbf16, #tpu.memory_space<vmem>>, vector<4x32x16xbf16>
    "tpu.trace_start"() <{level = 10 : i32, message = "hnd,hde->hne"}> : () -> ()
    %cst_17 = arith.constant dense<0.000000e+00> : vector<4x8x16xf32>
    %22 = tpu.matmul %15, %21, %cst_17 {dimension_numbers = #tpu.dot_dimension_numbers<[2], [1], [1], [2], [0, 0, 0, 1, 1, 2], [0], [0]>} : vector<4x8x32xbf16>, vector<4x32x16xbf16>, vector<4x8x16xf32> -> vector<4x8x16xf32>
    "tpu.trace_stop"() : () -> ()
    %23 = vector.shape_cast %9 : vector<4x16xf32> to vector<4x1x16xf32>
    %24 = vector.broadcast %23 : vector<4x1x16xf32> to vector<4x8x16xf32>
    %25 = arith.addf %22, %24 : vector<4x8x16xf32>
    %26 = vector.extract_strided_slice %25 {offsets = [0, 0, 0], sizes = [4, 8, 8], strides = [1, 1, 1]} : vector<4x8x16xf32> to vector<4x8x8xf32>
    %27 = vector.extract_strided_slice %25 {offsets = [0, 0, 8], sizes = [4, 8, 8], strides = [1, 1, 1]} : vector<4x8x16xf32> to vector<4x8x8xf32>
    %28 = arith.truncf %20 : vector<4x8x8xf32> to vector<4x8x8xbf16>
    %29 = arith.truncf %26 : vector<4x8x8xf32> to vector<4x8x8xbf16>
    "tpu.trace_start"() <{level = 10 : i32, message = "hqe,hke->hqk"}> : () -> ()
    %cst_18 = arith.constant dense<0.000000e+00> : vector<4x8x8xf32>
    %30 = tpu.matmul %28, %29, %cst_18 {dimension_numbers = #tpu.dot_dimension_numbers<[2], [2], [1], [1], [0, 0, 0, 1, 1, 1], [0], [0]>} : vector<4x8x8xbf16>, vector<4x8x8xbf16>, vector<4x8x8xf32> -> vector<4x8x8xf32>
    "tpu.trace_stop"() : () -> ()
    %cst_19 = arith.constant 0.353553385 : f32
    %31 = vector.broadcast %cst_19 : f32 to vector<4x8x8xf32>
    %32 = arith.mulf %30, %31 : vector<4x8x8xf32>
    %cst_20 = arith.constant dense<0xFF800000> : vector<4x8xf32>
    %33 = vector.multi_reduction <maximumf>, %32, %cst_20 [2] : vector<4x8x8xf32> to vector<4x8xf32>
    %34 = vector.shape_cast %33 : vector<4x8xf32> to vector<4x8x1xf32>
    %35 = vector.broadcast %34 : vector<4x8x1xf32> to vector<4x8x8xf32>
    %36 = arith.subf %32, %35 : vector<4x8x8xf32>
    %37 = math.exp %36 : vector<4x8x8xf32>
    %cst_21 = arith.constant dense<0.000000e+00> : vector<4x8xf32>
    %38 = vector.multi_reduction <add>, %37, %cst_21 [2] : vector<4x8x8xf32> to vector<4x8xf32>
    %39 = vector.shape_cast %38 : vector<4x8xf32> to vector<4x8x1xf32>
    %40 = vector.broadcast %39 : vector<4x8x1xf32> to vector<4x8x8xf32>
    %41 = arith.divf %37, %40 : vector<4x8x8xf32>
    %42 = arith.truncf %41 : vector<4x8x8xf32> to vector<4x8x8xbf16>
    %43 = arith.truncf %27 : vector<4x8x8xf32> to vector<4x8x8xbf16>
    "tpu.trace_start"() <{level = 10 : i32, message = "hqk,hke->hqe"}> : () -> ()
    %cst_22 = arith.constant dense<0.000000e+00> : vector<4x8x8xf32>
    %44 = tpu.matmul %42, %43, %cst_22 {dimension_numbers = #tpu.dot_dimension_numbers<[2], [1], [1], [2], [0, 0, 0, 1, 1, 2], [0], [0]>} : vector<4x8x8xbf16>, vector<4x8x8xbf16>, vector<4x8x8xf32> -> vector<4x8x8xf32>
    "tpu.trace_stop"() : () -> ()
    %c4 = arith.constant 4 : index
    %c0_23 = arith.constant 0 : index
    %45 = vector.load %arg9[%c4, %c0_23] : memref<11x128xf32, #tpu.memory_space<vmem>>, vector<1x32xf32>
    %46 = arith.truncf %44 : vector<4x8x8xf32> to vector<4x8x8xbf16>
    %c0_24 = arith.constant 0 : index
    %c0_25 = arith.constant 0 : index
    %c0_26 = arith.constant 0 : index
    %47 = vector.load %arg7[%c0_24, %c0_25, %c0_26] : memref<4x8x32xbf16, #tpu.memory_space<vmem>>, vector<4x8x32xbf16>
    "tpu.trace_start"() <{level = 10 : i32, message = "hqe,hef->hqf"}> : () -> ()
    %cst_27 = arith.constant dense<0.000000e+00> : vector<4x8x32xf32>
    %48 = tpu.matmul %46, %47, %cst_27 {dimension_numbers = #tpu.dot_dimension_numbers<[2], [1], [1], [2], [0, 0, 0, 1, 1, 2], [0], [0]>} : vector<4x8x8xbf16>, vector<4x8x32xbf16>, vector<4x8x32xf32> -> vector<4x8x32xf32>
    "tpu.trace_stop"() : () -> ()
    %cst_28 = arith.constant dense<0.000000e+00> : vector<8x32xf32>
    %49 = vector.multi_reduction <add>, %48, %cst_28 [0] : vector<4x8x32xf32> to vector<8x32xf32>
    %50 = vector.broadcast %45 : vector<1x32xf32> to vector<8x32xf32>
    %51 = arith.addf %49, %50 : vector<8x32xf32>
    %c0_29 = arith.constant 0 : index
    %c0_30 = arith.constant 0 : index
    %52 = vector.load %arg8[%c0_29, %c0_30] : memref<256x96xbf16, #tpu.memory_space<vmem>>, vector<32x96xbf16>
    %c32 = arith.constant 32 : index
    %c0_31 = arith.constant 0 : index
    %53 = vector.load %arg8[%c32, %c0_31] : memref<256x96xbf16, #tpu.memory_space<vmem>>, vector<32x96xbf16>
    %c5 = arith.constant 5 : index
    %c0_32 = arith.constant 0 : index
    %54 = vector.load %arg9[%c5, %c0_32] : memref<11x128xf32, #tpu.memory_space<vmem>>, vector<1x96xf32>
    %c6 = arith.constant 6 : index
    %c0_33 = arith.constant 0 : index
    %55 = vector.load %arg9[%c6, %c0_33] : memref<11x128xf32, #tpu.memory_space<vmem>>, vector<1x96xf32>
    %56 = arith.truncf %51 : vector<8x32xf32> to vector<8x32xbf16>
    %cst_34 = arith.constant dense<0.000000e+00> : vector<8x96xf32>
    %57 = tpu.matmul %56, %52, %cst_34 {dimension_numbers = #tpu.dot_dimension_numbers<[1], [0], [0], [1], [0, 0, 1, 1], [], []>} : vector<8x32xbf16>, vector<32x96xbf16>, vector<8x96xf32> -> vector<8x96xf32>
    %58 = vector.broadcast %54 : vector<1x96xf32> to vector<8x96xf32>
    %59 = arith.addf %57, %58 : vector<8x96xf32>
    %60 = arith.truncf %7 : vector<8x32xf32> to vector<8x32xbf16>
    %cst_35 = arith.constant dense<0.000000e+00> : vector<8x96xf32>
    %61 = tpu.matmul %60, %53, %cst_35 {dimension_numbers = #tpu.dot_dimension_numbers<[1], [0], [0], [1], [0, 0, 1, 1], [], []>} : vector<8x32xbf16>, vector<32x96xbf16>, vector<8x96xf32> -> vector<8x96xf32>
    %62 = vector.broadcast %55 : vector<1x96xf32> to vector<8x96xf32>
    %63 = arith.addf %61, %62 : vector<8x96xf32>
    %64 = vector.extract_strided_slice %59 {offsets = [0, 0], sizes = [8, 64], strides = [1, 1]} : vector<8x96xf32> to vector<8x64xf32>
    %65 = vector.extract_strided_slice %63 {offsets = [0, 0], sizes = [8, 64], strides = [1, 1]} : vector<8x96xf32> to vector<8x64xf32>
    %66 = arith.addf %64, %65 : vector<8x64xf32>
    %67 = arith.negf %66 : vector<8x64xf32>
    %68 = math.exp %67 : vector<8x64xf32>
    %cst_36 = arith.constant 1.000000e+00 : f32
    %69 = vector.broadcast %cst_36 : f32 to vector<8x64xf32>
    %70 = arith.addf %69, %68 : vector<8x64xf32>
    %71 = arith.divf %69, %70 : vector<8x64xf32>
    %72 = vector.extract_strided_slice %71 {offsets = [0, 0], sizes = [8, 32], strides = [1, 1]} : vector<8x64xf32> to vector<8x32xf32>
    %73 = vector.extract_strided_slice %71 {offsets = [0, 32], sizes = [8, 32], strides = [1, 1]} : vector<8x64xf32> to vector<8x32xf32>
    %74 = vector.extract_strided_slice %59 {offsets = [0, 64], sizes = [8, 32], strides = [1, 1]} : vector<8x96xf32> to vector<8x32xf32>
    %75 = vector.extract_strided_slice %63 {offsets = [0, 64], sizes = [8, 32], strides = [1, 1]} : vector<8x96xf32> to vector<8x32xf32>
    %76 = arith.mulf %72, %75 : vector<8x32xf32>
    %77 = arith.addf %74, %76 : vector<8x32xf32>
    %78 = math.tanh %77 : vector<8x32xf32>
    %cst_37 = arith.constant 1.000000e+00 : f32
    %79 = vector.broadcast %cst_37 : f32 to vector<8x32xf32>
    %80 = arith.subf %79, %73 : vector<8x32xf32>
    %81 = arith.mulf %80, %78 : vector<8x32xf32>
    %82 = arith.mulf %73, %7 : vector<8x32xf32>
    %83 = arith.addf %81, %82 : vector<8x32xf32>
    %c0_38 = arith.constant 0 : index
    %c0_39 = arith.constant 0 : index
    %84 = vector.load %arg12[%c0_38, %c0_39] : memref<8x32xf32, #tpu.memory_space<vmem>>, vector<8x32xf32>
    tpu.vector_store %arg12[%c0_38, %c0_39], %83 {strides = array<i32>} : memref<8x32xf32, #tpu.memory_space<vmem>>, vector<8x32xf32>,
    %c64 = arith.constant 64 : index
    %c0_40 = arith.constant 0 : index
    %85 = vector.load %arg8[%c64, %c0_40] : memref<256x96xbf16, #tpu.memory_space<vmem>>, vector<32x32xbf16>
    %c96 = arith.constant 96 : index
    %c0_41 = arith.constant 0 : index
    %86 = vector.load %arg8[%c96, %c0_41] : memref<256x96xbf16, #tpu.memory_space<vmem>>, vector<32x64xbf16>
    %c128 = arith.constant 128 : index
    %c0_42 = arith.constant 0 : index
    %87 = vector.load %arg8[%c128, %c0_42] : memref<256x96xbf16, #tpu.memory_space<vmem>>, vector<64x64xbf16>
    %c192 = arith.constant 192 : index
    %c0_43 = arith.constant 0 : index
    %88 = vector.load %arg8[%c192, %c0_43] : memref<256x96xbf16, #tpu.memory_space<vmem>>, vector<64x16xbf16>
    %c7 = arith.constant 7 : index
    %c0_44 = arith.constant 0 : index
    %89 = vector.load %arg9[%c7, %c0_44] : memref<11x128xf32, #tpu.memory_space<vmem>>, vector<1x32xf32>
    %c8_45 = arith.constant 8 : index
    %c0_46 = arith.constant 0 : index
    %90 = vector.load %arg9[%c8_45, %c0_46] : memref<11x128xf32, #tpu.memory_space<vmem>>, vector<1x64xf32>
    %c9 = arith.constant 9 : index
    %c0_47 = arith.constant 0 : index
    %91 = vector.load %arg9[%c9, %c0_47] : memref<11x128xf32, #tpu.memory_space<vmem>>, vector<1x64xf32>
    %c10 = arith.constant 10 : index
    %c0_48 = arith.constant 0 : index
    %92 = vector.load %arg9[%c10, %c0_48] : memref<11x128xf32, #tpu.memory_space<vmem>>, vector<1x16xf32>
    %93 = arith.truncf %83 : vector<8x32xf32> to vector<8x32xbf16>
    %cst_49 = arith.constant dense<0.000000e+00> : vector<8x32xf32>
    %94 = tpu.matmul %93, %85, %cst_49 {dimension_numbers = #tpu.dot_dimension_numbers<[1], [0], [0], [1], [0, 0, 1, 1], [], []>} : vector<8x32xbf16>, vector<32x32xbf16>, vector<8x32xf32> -> vector<8x32xf32>
    %95 = vector.broadcast %89 : vector<1x32xf32> to vector<8x32xf32>
    %96 = arith.addf %94, %95 : vector<8x32xf32>
    %cst_50 = arith.constant 0.000000e+00 : f32
    %97 = vector.broadcast %cst_50 : f32 to vector<8x32xf32>
    %98 = arith.maximumf %96, %97 : vector<8x32xf32>
    %99 = arith.truncf %98 : vector<8x32xf32> to vector<8x32xbf16>
    %cst_51 = arith.constant dense<0.000000e+00> : vector<8x64xf32>
    %100 = tpu.matmul %99, %86, %cst_51 {dimension_numbers = #tpu.dot_dimension_numbers<[1], [0], [0], [1], [0, 0, 1, 1], [], []>} : vector<8x32xbf16>, vector<32x64xbf16>, vector<8x64xf32> -> vector<8x64xf32>
    %101 = vector.broadcast %90 : vector<1x64xf32> to vector<8x64xf32>
    %102 = arith.addf %100, %101 : vector<8x64xf32>
    %cst_52 = arith.constant 0.000000e+00 : f32
    %103 = vector.broadcast %cst_52 : f32 to vector<8x64xf32>
    %104 = arith.maximumf %102, %103 : vector<8x64xf32>
    %105 = arith.truncf %104 : vector<8x64xf32> to vector<8x64xbf16>
    %cst_53 = arith.constant dense<0.000000e+00> : vector<8x64xf32>
    %106 = tpu.matmul %105, %87, %cst_53 {dimension_numbers = #tpu.dot_dimension_numbers<[1], [0], [0], [1], [0, 0, 1, 1], [], []>} : vector<8x64xbf16>, vector<64x64xbf16>, vector<8x64xf32> -> vector<8x64xf32>
    %107 = vector.broadcast %91 : vector<1x64xf32> to vector<8x64xf32>
    %108 = arith.addf %106, %107 : vector<8x64xf32>
    %cst_54 = arith.constant 0.000000e+00 : f32
    %109 = vector.broadcast %cst_54 : f32 to vector<8x64xf32>
    %110 = arith.maximumf %108, %109 : vector<8x64xf32>
    %111 = arith.truncf %110 : vector<8x64xf32> to vector<8x64xbf16>
    %cst_55 = arith.constant dense<0.000000e+00> : vector<8x16xf32>
    %112 = tpu.matmul %111, %88, %cst_55 {dimension_numbers = #tpu.dot_dimension_numbers<[1], [0], [0], [1], [0, 0, 1, 1], [], []>} : vector<8x64xbf16>, vector<64x16xbf16>, vector<8x16xf32> -> vector<8x16xf32>
    %113 = vector.broadcast %92 : vector<1x16xf32> to vector<8x16xf32>
    %114 = arith.addf %112, %113 : vector<8x16xf32>
    %cst_56 = arith.constant 0.000000e+00 : f32
    %115 = vector.broadcast %cst_56 : f32 to vector<8x80xf32>
    %116 = tpu.concatenate %83, %114, %115 in 1 : vector<8x32xf32>, vector<8x16xf32>, vector<8x80xf32> -> vector<8x128xf32>
    %c0_57 = arith.constant 0 : index
    %c0_58 = arith.constant 0 : index
    %c0_59 = arith.constant 0 : index
    %117 = vector.load %arg10[%c0_57, %c0_58, %c0_59] : memref<1x8x128xf32, #tpu.memory_space<vmem>>, vector<1x8x128xf32>
    %118 = vector.shape_cast %117 : vector<1x8x128xf32> to vector<8x128xf32>
    %119 = vector.shape_cast %116 : vector<8x128xf32> to vector<1x8x128xf32>
    tpu.vector_store %arg10[%c0_57, %c0_58, %c0_59], %119 {strides = array<i32>} : memref<1x8x128xf32, #tpu.memory_space<vmem>>, vector<1x8x128xf32>,
    %c0_60 = arith.constant 0 : index
    %c0_61 = arith.constant 0 : index
    %c0_62 = arith.constant 0 : index
    %c0_63 = arith.constant 0 : index
    %120 = vector.load %arg11[%c0_60, %c0_61, %c0_62, %c0_63] : memref<1x4x8x8xf32, #tpu.memory_space<vmem>>, vector<1x4x8x8xf32>
    %121 = vector.shape_cast %120 : vector<1x4x8x8xf32> to vector<4x8x8xf32>
    %122 = vector.shape_cast %41 : vector<4x8x8xf32> to vector<1x4x8x8xf32>
    tpu.vector_store %arg11[%c0_60, %c0_61, %c0_62, %c0_63], %122 {strides = array<i32>} : memref<1x4x8x8xf32, #tpu.memory_space<vmem>>, vector<1x4x8x8xf32>,
    return
  }
  func.func @transform_0(%arg0: i32, %arg1: i32) -> (i32, i32, i32) {
    %c0_i32 = arith.constant 0 : i32
    %c0_i32_0 = arith.constant 0 : i32
    return %arg1, %arg0, %c0_i32 : i32, i32, i32
  }
  func.func @transform_1(%arg0: i32, %arg1: i32) -> (i32, i32, i32) {
    %c0_i32 = arith.constant 0 : i32
    %c0_i32_0 = arith.constant 0 : i32
    %c0_i32_1 = arith.constant 0 : i32
    return %arg1, %c0_i32, %c0_i32_0 : i32, i32, i32
  }
  func.func @transform_2(%arg0: i32, %arg1: i32) -> (i32, i32) {
    %c0_i32 = arith.constant 0 : i32
    %c0_i32_0 = arith.constant 0 : i32
    return %arg0, %c0_i32 : i32, i32
  }
  func.func @transform_3(%arg0: i32, %arg1: i32) -> (i32, i32, i32) {
    %c0_i32 = arith.constant 0 : i32
    %c0_i32_0 = arith.constant 0 : i32
    %c0_i32_1 = arith.constant 0 : i32
    %c0_i32_2 = arith.constant 0 : i32
    return %c0_i32, %c0_i32_0, %c0_i32_1 : i32, i32, i32
  }
  func.func @transform_4(%arg0: i32, %arg1: i32) -> (i32, i32, i32) {
    %c0_i32 = arith.constant 0 : i32
    %c0_i32_0 = arith.constant 0 : i32
    %c0_i32_1 = arith.constant 0 : i32
    %c0_i32_2 = arith.constant 0 : i32
    return %c0_i32, %c0_i32_0, %c0_i32_1 : i32, i32, i32
  }
  func.func @transform_5(%arg0: i32, %arg1: i32) -> (i32, i32, i32) {
    %c0_i32 = arith.constant 0 : i32
    %c0_i32_0 = arith.constant 0 : i32
    %c0_i32_1 = arith.constant 0 : i32
    %c0_i32_2 = arith.constant 0 : i32
    return %c0_i32, %c0_i32_0, %c0_i32_1 : i32, i32, i32
  }
  func.func @transform_6(%arg0: i32, %arg1: i32) -> (i32, i32) {
    %c0_i32 = arith.constant 0 : i32
    %c0_i32_0 = arith.constant 0 : i32
    %c0_i32_1 = arith.constant 0 : i32
    return %c0_i32, %c0_i32_0 : i32, i32
  }
  func.func @transform_7(%arg0: i32, %arg1: i32) -> (i32, i32) {
    %c0_i32 = arith.constant 0 : i32
    %c0_i32_0 = arith.constant 0 : i32
    %c0_i32_1 = arith.constant 0 : i32
    return %c0_i32, %c0_i32_0 : i32, i32
  }
  func.func @transform_8(%arg0: i32, %arg1: i32) -> (i32, i32, i32) {
    %c0_i32 = arith.constant 0 : i32
    %c0_i32_0 = arith.constant 0 : i32
    return %arg1, %arg0, %c0_i32 : i32, i32, i32
  }
  func.func @transform_9(%arg0: i32, %arg1: i32) -> (i32, i32, i32, i32) {
    %c0_i32 = arith.constant 0 : i32
    %c0_i32_0 = arith.constant 0 : i32
    %c0_i32_1 = arith.constant 0 : i32
    return %arg1, %c0_i32, %arg0, %c0_i32_0 : i32, i32, i32, i32
  }
}

</mosaic_0001>

<llo_original>
// kernel: tpu_custom_call.1
$region0: #{tpu_custom_call.1}
  #allocation0 [shape = 'u32[]', space=smem, size = 0x4, offset = 0x4, fixed_abs, tag = 'smem constant byte address 0x4 - core index']
  #allocation1 [shape = 'u32[72,128]{1,0:T(1,128)}', space=vmem, size = 0x9000, scoped, tag = 'internal scratch']
  #allocation2 [shape = 'f32[8,32]{1,0:T(8,128)}', space=vmem, size = 0x1000, scoped, tag = 'scratch operand']
  %s0 = inlined_call_operand.vmem [shape: bf16[4,8,32], index: 0, kind: input, shape index: {}]
  %s1 = inlined_call_operand.vmem [shape: bf16[4,8,32], index: 1, kind: input, shape index: {}]
  %s2 = inlined_call_operand.vmem [shape: f32[8,32], index: 2, kind: input, shape index: {}]
  %s3 = inlined_call_operand.vmem [shape: bf16[4,32,8], index: 3, kind: input, shape index: {}]
  %s4 = inlined_call_operand.vmem [shape: bf16[4,32,16], index: 4, kind: input, shape index: {}]
  %s5 = inlined_call_operand.vmem [shape: bf16[4,8,32], index: 5, kind: input, shape index: {}]
  %s6 = inlined_call_operand.vmem [shape: bf16[256,96], index: 6, kind: input, shape index: {}]
  %s7 = inlined_call_operand.vmem [shape: f32[11,128], index: 7, kind: input, shape index: {}]
  %s8 = inlined_call_operand.hbm [shape: f32[4,8,128], index: 8, kind: output, shape index: {0}]
  %s9 = inlined_call_operand.hbm [shape: f32[4,4,8,8], index: 9, kind: output, shape index: {1}]
  %10 = xla_tuple %s8, %s9
  %s11 = sld [smem:[#allocation0]]
  $region77: #{tpu_custom_call.1} parent=0
    _
  %s13 = ssub.s32 1, %s11
  %s14 = scalar_select 0, %s13, %s11
  $region1: #{tpu_custom_call.1} parent=0
    #allocation3 [shape = 'u8[8192]{0}', space=vmem, size = 0x2000, scoped, tag = 'output window, operand 0']
    #allocation4 [shape = 's32[2]{0}', space=sflag, size = 0x8, scoped, tag = 'scoped memory for tpu_custom_call.1']
    #allocation5 [shape = 'u8[32768]{0}', space=vmem, size = 0x8000, scoped, tag = 'output window, operand 1']
    #allocation6 [shape = 's32[2]{0}', space=sflag, size = 0x8, scoped, tag = 'scoped memory for tpu_custom_call.1']
    %15 = vsyncpa [#allocation4], 0
    %s16 = scalar_lea.sflag [#allocation4], 1
    %17 = vsyncpa %s16, 0
    %18 = vsyncpa [#allocation6], 0
    %s19 = scalar_lea.sflag [#allocation6], 1
    %20 = vsyncpa %s19, 0
    loop: start=0, step=1, limit=6
    $region2: #{tpu_custom_call.1} parent=1 // loop_pre_header
      _
    $region3: #{tpu_custom_call.1} parent=1 // loop_header
      %s22 = sphi 0, %s26
      %p23 = scmp.ge.s32.totalorder %s22, 6
      %s29 = sphi 0, %s41
      %s30 = sphi 0, %s37
      %s31 = sphi 0, %s29
      %s32 = sphi 0, %s30
      %s33 = sphi 0, %s31
      %s34 = sphi 0, %s32
      %s46 = sphi 0, %s48
      %s49 = sphi 0, %s46
      %s50 = sphi 0, %s49
      %s66 = sphi 0, %s50
      %s72 = sphi 0, %s74
      %s75 = sphi 0, %s72
      %s76 = sphi 0, %s75
      %s92 = sphi 0, %s76
      %s98 = sphi 0, %s100
      %s101 = sphi 0, %s98
      %s102 = sphi 0, %s101
      %s118 = sphi 0, %s102
      %s122 = sphi 0, %s122
      %s124 = sphi 0, %s122
      %s125 = sphi 0, %s124
      %s139 = sphi 0, %s125
      %s143 = sphi 0, %s143
      %s145 = sphi 0, %s143
      %s146 = sphi 0, %s145
      %s160 = sphi 0, %s146
      %s164 = sphi 0, %s164
      %s166 = sphi 0, %s164
      %s167 = sphi 0, %s166
      %s181 = sphi 0, %s167
      %s185 = sphi 0, %s185
      %s187 = sphi 0, %s185
      %s188 = sphi 0, %s187
      %s202 = sphi 0, %s188
      %s206 = sphi 0, %s206
      %s208 = sphi 0, %s206
      %s209 = sphi 0, %s208
      %s223 = sphi 0, %s209
      %s231 = sphi 0, %s233
      %s234 = sphi 0, %s231
      %s235 = sphi 0, %s234
      %s251 = sphi 0, %s235
      %s259 = sphi 0, %s261
      %s262 = sphi 0, %s259
      %s263 = sphi 0, %s262
      %s279 = sphi 0, %s263
    $region4: #{tpu_custom_call.1} parent=1 // loop_header_branch
      %25 = sbr.rel (%p23) target = $region8
    $region5: #{tpu_custom_call.1} parent=1 // loop_body
      %s27 = ssub.s32 %s22, 1
      %s28 = ssub.s32 %s22, 2
      %s35 = sadd.s32 1, %s30
      %p36 = scmp.ge.s32.totalorder %s35, 4
      %s37 = scalar_select %p36, 0, %s35
      %s38 = sadd.s32 1, %s29
      %s39 = scalar_select %p36, %s38, %s29
      %p40 = scmp.ge.s32.totalorder %s39, 1
      %s41 = scalar_select %p40, 0, %s39
      %s42 = ssub.s32 %s30, %s37
      %s43 = ssub.s32 %s29, %s41
      %s44 = sor.u32 %s42, %s43
      %p45 = scmp.eq.s32.totalorder %s44, 0
      %s47 = sadd.s32 %s46, 1
      %s48 = scalar_select %p45, %s46, %s47
      %p51 = pneg %p45
      %p52 = scmp.eq.s32.totalorder %s22, 3
      %p53 = por %p51, %p52
      %p54 = scmp.ne.s32.totalorder %s46, %s49
      %p55 = scmp.eq.s32.totalorder %s22, 0
      %p56 = por %p54, %p55
      %p57 = scmp.ne.s32.totalorder %s46, %s49
      %p58 = scmp.eq.s32.totalorder %s27, 3
      %p59 = por %p57, %p58
      %p60 = scmp.ne.s32.totalorder %s49, %s50
      %p61 = scmp.eq.s32.totalorder %s27, 0
      %p62 = por %p60, %p61
      %p63 = scmp.ne.s32.totalorder %s49, %s50
      %p64 = scmp.eq.s32.totalorder %s28, 3
      %p65 = por %p63, %p64
      %p67 = scmp.ne.s32.totalorder %s50, %s66
      %p68 = scmp.eq.s32.totalorder %s28, 0
      %p69 = por %p67, %p68
      %s70 = ssub.s32 %s30, %s37
      %p71 = scmp.eq.s32.totalorder %s70, 0
      %s73 = sadd.s32 %s72, 1
      %s74 = scalar_select %p71, %s72, %s73
      %p77 = pneg %p71
      %p78 = scmp.eq.s32.totalorder %s22, 3
      %p79 = por %p77, %p78
      %p80 = scmp.ne.s32.totalorder %s72, %s75
      %p81 = scmp.eq.s32.totalorder %s22, 0
      %p82 = por %p80, %p81
      %p83 = scmp.ne.s32.totalorder %s72, %s75
      %p84 = scmp.eq.s32.totalorder %s27, 3
      %p85 = por %p83, %p84
      %p86 = scmp.ne.s32.totalorder %s75, %s76
      %p87 = scmp.eq.s32.totalorder %s27, 0
      %p88 = por %p86, %p87
      %p89 = scmp.ne.s32.totalorder %s75, %s76
      %p90 = scmp.eq.s32.totalorder %s28, 3
      %p91 = por %p89, %p90
      %p93 = scmp.ne.s32.totalorder %s76, %s92
      %p94 = scmp.eq.s32.totalorder %s28, 0
      %p95 = por %p93, %p94
      %s96 = ssub.s32 %s29, %s41
      %p97 = scmp.eq.s32.totalorder %s96, 0
      %s99 = sadd.s32 %s98, 1
      %s100 = scalar_select %p97, %s98, %s99
      %p103 = pneg %p97
      %p104 = scmp.eq.s32.totalorder %s22, 3
      %p105 = por %p103, %p104
      %p106 = scmp.ne.s32.totalorder %s98, %s101
      %p107 = scmp.eq.s32.totalorder %s22, 0
      %p108 = por %p106, %p107
      %p109 = scmp.ne.s32.totalorder %s98, %s101
      %p110 = scmp.eq.s32.totalorder %s27, 3
      %p111 = por %p109, %p110
      %p112 = scmp.ne.s32.totalorder %s101, %s102
      %p113 = scmp.eq.s32.totalorder %s27, 0
      %p114 = por %p112, %p113
      %p115 = scmp.ne.s32.totalorder %s101, %s102
      %p116 = scmp.eq.s32.totalorder %s28, 3
      %p117 = por %p115, %p116
      %p119 = scmp.ne.s32.totalorder %s102, %s118
      %p120 = scmp.eq.s32.totalorder %s28, 0
      %p121 = por %p119, %p120
      %s123 = sadd.s32 %s122, 1
      %p126 = scmp.eq.s32.totalorder %s22, 3
      %p127 = scmp.ne.s32.totalorder %s122, %s124
      %p128 = scmp.eq.s32.totalorder %s22, 0
      %p129 = por %p127, %p128
      %p130 = scmp.ne.s32.totalorder %s122, %s124
      %p131 = scmp.eq.s32.totalorder %s27, 3
      %p132 = por %p130, %p131
      %p133 = scmp.ne.s32.totalorder %s124, %s125
      %p134 = scmp.eq.s32.totalorder %s27, 0
      %p135 = por %p133, %p134
      %p136 = scmp.ne.s32.totalorder %s124, %s125
      %p137 = scmp.eq.s32.totalorder %s28, 3
      %p138 = por %p136, %p137
      %p140 = scmp.ne.s32.totalorder %s125, %s139
      %p141 = scmp.eq.s32.totalorder %s28, 0
      %p142 = por %p140, %p141
      %s144 = sadd.s32 %s143, 1
      %p147 = scmp.eq.s32.totalorder %s22, 3
      %p148 = scmp.ne.s32.totalorder %s143, %s145
      %p149 = scmp.eq.s32.totalorder %s22, 0
      %p150 = por %p148, %p149
      %p151 = scmp.ne.s32.totalorder %s143, %s145
      %p152 = scmp.eq.s32.totalorder %s27, 3
      %p153 = por %p151, %p152
      %p154 = scmp.ne.s32.totalorder %s145, %s146
      %p155 = scmp.eq.s32.totalorder %s27, 0
      %p156 = por %p154, %p155
      %p157 = scmp.ne.s32.totalorder %s145, %s146
      %p158 = scmp.eq.s32.totalorder %s28, 3
      %p159 = por %p157, %p158
      %p161 = scmp.ne.s32.totalorder %s146, %s160
      %p162 = scmp.eq.s32.totalorder %s28, 0
      %p163 = por %p161, %p162
      %s165 = sadd.s32 %s164, 1
      %p168 = scmp.eq.s32.totalorder %s22, 3
      %p169 = scmp.ne.s32.totalorder %s164, %s166
      %p170 = scmp.eq.s32.totalorder %s22, 0
      %p171 = por %p169, %p170
      %p172 = scmp.ne.s32.totalorder %s164, %s166
      %p173 = scmp.eq.s32.totalorder %s27, 3
      %p174 = por %p172, %p173
      %p175 = scmp.ne.s32.totalorder %s166, %s167
      %p176 = scmp.eq.s32.totalorder %s27, 0
      %p177 = por %p175, %p176
      %p178 = scmp.ne.s32.totalorder %s166, %s167
      %p179 = scmp.eq.s32.totalorder %s28, 3
      %p180 = por %p178, %p179
      %p182 = scmp.ne.s32.totalorder %s167, %s181
      %p183 = scmp.eq.s32.totalorder %s28, 0
      %p184 = por %p182, %p183
      %s186 = sadd.s32 %s185, 1
      %p189 = scmp.eq.s32.totalorder %s22, 3
      %p190 = scmp.ne.s32.totalorder %s185, %s187
      %p191 = scmp.eq.s32.totalorder %s22, 0
      %p192 = por %p190, %p191
      %p193 = scmp.ne.s32.totalorder %s185, %s187
      %p194 = scmp.eq.s32.totalorder %s27, 3
      %p195 = por %p193, %p194
      %p196 = scmp.ne.s32.totalorder %s187, %s188
      %p197 = scmp.eq.s32.totalorder %s27, 0
      %p198 = por %p196, %p197
      %p199 = scmp.ne.s32.totalorder %s187, %s188
      %p200 = scmp.eq.s32.totalorder %s28, 3
      %p201 = por %p199, %p200
      %p203 = scmp.ne.s32.totalorder %s188, %s202
      %p204 = scmp.eq.s32.totalorder %s28, 0
      %p205 = por %p203, %p204
      %s207 = sadd.s32 %s206, 1
      %p210 = scmp.eq.s32.totalorder %s22, 3
      %p211 = scmp.ne.s32.totalorder %s206, %s208
      %p212 = scmp.eq.s32.totalorder %s22, 0
      %p213 = por %p211, %p212
      %p214 = scmp.ne.s32.totalorder %s206, %s208
      %p215 = scmp.eq.s32.totalorder %s27, 3
      %p216 = por %p214, %p215
      %p217 = scmp.ne.s32.totalorder %s208, %s209
      %p218 = scmp.eq.s32.totalorder %s27, 0
      %p219 = por %p217, %p218
      %p220 = scmp.ne.s32.totalorder %s208, %s209
      %p221 = scmp.eq.s32.totalorder %s28, 3
      %p222 = por %p220, %p221
      %p224 = scmp.ne.s32.totalorder %s209, %s223
      %p225 = scmp.eq.s32.totalorder %s28, 0
      %p226 = por %p224, %p225
      %s227 = ssub.s32 %s30, %s37
      %s228 = ssub.s32 %s29, %s41
      %s229 = sor.u32 %s227, %s228
      %p230 = scmp.eq.s32.totalorder %s229, 0
      %s232 = sadd.s32 %s231, 1
      %s233 = scalar_select %p230, %s231, %s232
      %p236 = pneg %p230
      %p237 = scmp.eq.s32.totalorder %s22, 3
      %p238 = por %p236, %p237
      %p239 = scmp.ne.s32.totalorder %s231, %s234
      %p240 = scmp.eq.s32.totalorder %s22, 0
      %p241 = por %p239, %p240
      %p242 = scmp.ne.s32.totalorder %s231, %s234
      %p243 = scmp.eq.s32.totalorder %s27, 3
      %p244 = por %p242, %p243
      %p245 = scmp.ne.s32.totalorder %s234, %s235
      %p246 = scmp.eq.s32.totalorder %s27, 0
      %p247 = por %p245, %p246
      %p248 = scmp.ne.s32.totalorder %s234, %s235
      %p249 = scmp.eq.s32.totalorder %s28, 3
      %p250 = por %p248, %p249
      %p252 = scmp.ne.s32.totalorder %s235, %s251
      %p253 = scmp.eq.s32.totalorder %s28, 0
      %p254 = por %p252, %p253
      %s255 = ssub.s32 %s30, %s37
      %s256 = ssub.s32 %s29, %s41
      %s257 = sor.u32 %s255, %s256
      %p258 = scmp.eq.s32.totalorder %s257, 0
      %s260 = sadd.s32 %s259, 1
      %s261 = scalar_select %p258, %s259, %s260
      %p264 = pneg %p258
      %p265 = scmp.eq.s32.totalorder %s22, 3
      %p266 = por %p264, %p265
      %p267 = scmp.ne.s32.totalorder %s259, %s262
      %p268 = scmp.eq.s32.totalorder %s22, 0
      %p269 = por %p267, %p268
      %p270 = scmp.ne.s32.totalorder %s259, %s262
      %p271 = scmp.eq.s32.totalorder %s27, 3
      %p272 = por %p270, %p271
      %p273 = scmp.ne.s32.totalorder %s262, %s263
      %p274 = scmp.eq.s32.totalorder %s27, 0
      %p275 = por %p273, %p274
      %p276 = scmp.ne.s32.totalorder %s262, %s263
      %p277 = scmp.eq.s32.totalorder %s28, 3
      %p278 = por %p276, %p277
      %p280 = scmp.ne.s32.totalorder %s263, %s279
      %p281 = scmp.eq.s32.totalorder %s28, 0
      %p282 = por %p280, %p281
      %p283 = scmp.le.s32.totalorder 1, %s22
      %p284 = scmp.lt.s32.totalorder %s22, 5
      %p285 = pnand %p283, %p284
      %p286 = pneg %p285
      // Predicated region
      $region9: #{tpu_custom_call.1} parent=5 // pred_check
        _
      $region10: #{tpu_custom_call.1} parent=5 // pred_check_branch
        %288 = sbr.rel (%p285) target = $region12
      $region11: #{tpu_custom_call.1} parent=5 // pred_region
        %s289 = ssub.s32 %s22, 1
        // Predicated region
        $region13: #{tpu_custom_call.1} parent=11 // pred_check
          %p290 = pneg %p114
        $region14: #{tpu_custom_call.1} parent=11 // pred_check_branch
          %292 = sbr.rel (%p290) target = $region16
        $region15: #{tpu_custom_call.1} parent=11 // pred_region
          %p293 = scmp.lt.s32.totalorder %s31, 0
          %s294 = scalar_select %p293, %s31, 0
          %s295 = smul.addr %s294, 8
          %s296 = scalar_lea.vmem %s2, %s295
        $region16: #{tpu_custom_call.1} parent=11 // pred_fallthru
          _
        // Predicated region
        $region17: #{tpu_custom_call.1} parent=11 // pred_check
          %p297 = pneg %p135
        $region18: #{tpu_custom_call.1} parent=11 // pred_check_branch
          %299 = sbr.rel (%p297) target = $region20
        $region19: #{tpu_custom_call.1} parent=11 // pred_region
          _
        $region20: #{tpu_custom_call.1} parent=11 // pred_fallthru
          _
        // Predicated region
        $region21: #{tpu_custom_call.1} parent=11 // pred_check
          %p300 = pneg %p156
        $region22: #{tpu_custom_call.1} parent=11 // pred_check_branch
          %302 = sbr.rel (%p300) target = $region24
        $region23: #{tpu_custom_call.1} parent=11 // pred_region
          _
        $region24: #{tpu_custom_call.1} parent=11 // pred_fallthru
          _
        // Predicated region
        $region25: #{tpu_custom_call.1} parent=11 // pred_check
          %p303 = pneg %p177
        $region26: #{tpu_custom_call.1} parent=11 // pred_check_branch
          %305 = sbr.rel (%p303) target = $region28
        $region27: #{tpu_custom_call.1} parent=11 // pred_region
          _
        $region28: #{tpu_custom_call.1} parent=11 // pred_fallthru
          _
        // Predicated region
        $region29: #{tpu_custom_call.1} parent=11 // pred_check
          %p306 = pneg %p198
        $region30: #{tpu_custom_call.1} parent=11 // pred_check_branch
          %308 = sbr.rel (%p306) target = $region32
        $region31: #{tpu_custom_call.1} parent=11 // pred_region
          _
        $region32: #{tpu_custom_call.1} parent=11 // pred_fallthru
          _
        // Predicated region
        $region33: #{tpu_custom_call.1} parent=11 // pred_check
          %p309 = pneg %p219
        $region34: #{tpu_custom_call.1} parent=11 // pred_check_branch
          %311 = sbr.rel (%p309) target = $region36
        $region35: #{tpu_custom_call.1} parent=11 // pred_region
          _
        $region36: #{tpu_custom_call.1} parent=11 // pred_fallthru
          _
      $region12: #{tpu_custom_call.1} parent=5 // pred_fallthru
        _
      %p312 = scmp.lt.s32.totalorder %s22, 4
      // Predicated region
      $region37: #{tpu_custom_call.1} parent=5 // pred_check
        %p313 = pneg %p312
      $region38: #{tpu_custom_call.1} parent=5 // pred_check_branch
        %315 = sbr.rel (%p313) target = $region40
      $region39: #{tpu_custom_call.1} parent=5 // pred_region
        // Predicated region
        $region41: #{tpu_custom_call.1} parent=39 // pred_check
          %p316 = pneg %p56
        $region42: #{tpu_custom_call.1} parent=39 // pred_check_branch
          %318 = sbr.rel (%p316) target = $region44
        $region43: #{tpu_custom_call.1} parent=39 // pred_region
          %p319 = scmp.lt.s32.totalorder %s30, 3
          %s320 = scalar_select %p319, %s30, 3
          %p321 = scmp.lt.s32.totalorder %s29, 0
          %s322 = scalar_select %p321, %s29, 0
          %s323 = sadd.s32 %s322, %s320
          %s324 = smul.addr %s323, 4
          %s325 = scalar_lea.vmem %s0, %s324
        $region44: #{tpu_custom_call.1} parent=39 // pred_fallthru
          _
        // Predicated region
        $region45: #{tpu_custom_call.1} parent=39 // pred_check
          %p326 = pneg %p82
        $region46: #{tpu_custom_call.1} parent=39 // pred_check_branch
          %328 = sbr.rel (%p326) target = $region48
        $region47: #{tpu_custom_call.1} parent=39 // pred_region
          %p329 = scmp.lt.s32.totalorder %s30, 3
          %s330 = scalar_select %p329, %s30, 3
          %s331 = smul.addr %s330, 4
          %s332 = scalar_lea.vmem %s1, %s331
        $region48: #{tpu_custom_call.1} parent=39 // pred_fallthru
          _
      $region40: #{tpu_custom_call.1} parent=5 // pred_fallthru
        _
      %p333 = scmp.le.s32.totalorder 1, %s22
      %p334 = scmp.lt.s32.totalorder %s22, 5
      %p335 = pnand %p333, %p334
      %p336 = pneg %p335
      // Predicated region
      $region49: #{tpu_custom_call.1} parent=5 // pred_check
        _
      $region50: #{tpu_custom_call.1} parent=5 // pred_check_branch
        %338 = sbr.rel (%p335) target = $region52
      $region51: #{tpu_custom_call.1} parent=5 // pred_region
        %s339 = ssub.s32 %s22, 1
        %p340 = scmp.lt.s32.totalorder %s32, 3
        %s341 = scalar_select %p340, %s32, 3
        %p342 = scmp.lt.s32.totalorder %s31, 0
        %s343 = scalar_select %p342, %s31, 0
        %s344 = sadd.s32 %s343, %s341
        %s345 = smul.addr %s344, 4
        %s346 = scalar_lea.vmem %s0, %s345
        %p347 = pneg %p62
        %p348 = pneg %p59
        %p349 = scmp.lt.s32.totalorder %s32, 3
        %s350 = scalar_select %p349, %s32, 3
        %s351 = smul.addr %s350, 4
        %s352 = scalar_lea.vmem %s1, %s351
        %p353 = pneg %p88
        %p354 = pneg %p85
        %p355 = scmp.lt.s32.totalorder %s31, 0
        %s356 = scalar_select %p355, %s31, 0
        %s357 = smul.addr %s356, 8
        %s358 = scalar_lea.vmem %s2, %s357
        %p359 = pneg %p114
        %p360 = pneg %p111
        %p361 = pneg %p135
        %p362 = pneg %p132
        %p363 = pneg %p156
        %p364 = pneg %p153
        %p365 = pneg %p177
        %p366 = pneg %p174
        %p367 = pneg %p198
        %p368 = pneg %p195
        %p369 = pneg %p219
        %p370 = pneg %p216
        %p371 = pneg %p247
        %p372 = pneg %p244
        %s373 = sand.u32 %s234, 1
        %s374 = scalar_lea.sflag [#allocation4], %s373
        %s375 = sand.u32 %s234, 1
        %s376 = smul.addr %s375, 8
        %s377 = scalar_lea.vmem [#allocation3], %s376
        %p378 = pneg %p275
        %p379 = pneg %p272
        %s380 = sand.u32 %s262, 1
        %s381 = scalar_lea.sflag [#allocation6], %s380
        %s382 = sand.u32 %s262, 1
        %s383 = smul.addr %s382, 32
        %s384 = scalar_lea.vmem [#allocation5], %s383
        %p385 = scmp.lt.s32.totalorder %s32, 3
        %s386 = scalar_select %p385, %s32, 3
        %p387 = scmp.lt.s32.totalorder %s31, 0
        %s388 = scalar_select %p387, %s31, 0
        %s389 = sadd.s32 %s388, %s386
        %s390 = smul.addr %s389, 4
        %s391 = scalar_lea.vmem %s0, %s390
        %p392 = scmp.lt.s32.totalorder %s32, 3
        %s393 = scalar_select %p392, %s32, 3
        %s394 = smul.addr %s393, 4
        %s395 = scalar_lea.vmem %s1, %s394
        %p396 = scmp.lt.s32.totalorder %s31, 0
        %s397 = scalar_select %p396, %s31, 0
        %s398 = smul.addr %s397, 8
        %s399 = scalar_lea.vmem %s2, %s398
        %p401 = scmp.eq.s32.totalorder %s32, 0
        // Predicated region
        $region53: #{tpu_custom_call.1} parent=51 // pred_check
          %p402 = pneg %p401
        $region54: #{tpu_custom_call.1} parent=51 // pred_check_branch
          %404 = sbr.rel (%p402) target = $region56
        $region55: #{tpu_custom_call.1} parent=51 // pred_region
          %v405 = vld [vmem:[%s399] sm:$0xff]
          %vm406 = vcmask 261120
          %407 = vst.msk [vmem:[#allocation2] sm:$0xff] %vm406, %v405
        $region56: #{tpu_custom_call.1} parent=51 // pred_fallthru
          _
        %v408 = vld [vmem:[%s391] sm:$0xf]
        %v409 = vld [vmem:[%s395] sm:$0xf]
        %v410 = vld [vmem:[#allocation2] sm:$0xff]
        %v411 = vld [vmem:[%s7] sm:$0xf]
        %v412 = vld [vmem:[%s3] sm:$0xf]
        %v413 = vld [vmem:[%s3 + $0x4] sm:$0xf]
        %v414 = vld [vmem:[%s3 + $0x8] sm:$0xf]
        %v415 = vld [vmem:[%s3 + $0xc] sm:$0xf]
        %v416 = vld [vmem:[%s3 + $0x10] sm:$0xf]
        %v417 = vld [vmem:[%s3 + $0x14] sm:$0xf]
        %v418 = vld [vmem:[%s3 + $0x18] sm:$0xf]
        %v419 = vld [vmem:[%s3 + $0x1c] sm:$0xf]
        %v420 = vld [vmem:[%s3 + $0x20] sm:$0xf]
        %v421 = vld [vmem:[%s3 + $0x24] sm:$0xf]
        %v422 = vld [vmem:[%s3 + $0x28] sm:$0xf]
        %v423 = vld [vmem:[%s3 + $0x2c] sm:$0xf]
        %v424 = vld [vmem:[%s3 + $0x30] sm:$0xf]
        %v425 = vld [vmem:[%s3 + $0x34] sm:$0xf]
        %v426 = vld [vmem:[%s3 + $0x38] sm:$0xf]
        %v427 = vld [vmem:[%s3 + $0x3c] sm:$0xf]
        %v429 = vrot.slane %v411, 1
        %v430 = vrot.slane %v411, 2
        %v431 = vrot.slane %v411, 3
        %v432 = vperm.slane %v411, 0
        %v433 = vperm.slane %v429, 0
        %v434 = vperm.slane %v430, 0
        %v435 = vperm.slane %v431, 0
        %v444 = vunpack.c.l.b16 %v412
        %v445 = vunpack.c.l.b16 %v413
        %v446 = vunpack.c.l.b16 %v414
        %v447 = vunpack.c.l.b16 %v415
        %v448 = vpack.c.b16 %v445, %v444
        %v449 = vpack.c.b16 %v447, %v446
        %vm452 = vcmask 261120
        %v454 = vsel %vm452, %v408, 0
        %456 = vmatpush.bf16.msra.mxu0 0
        %457 = vmatpush.bf16.msra.mxu0 0
        %458 = vmatpush.bf16.msra.mxu0 0
        %459 = vmatpush.bf16.msra.mxu0 0
        %460 = vmatpush.bf16.msra.mxu0 0
        %461 = vmatpush.bf16.msra.mxu0 0
        %462 = vmatpush.bf16.msra.mxu0 %v449
        %463 = vmatpush.bf16.msra.mxu0 %v448
        %464 = vmatmul.bf16.gmra.mxu0 %v454
        %v465 = vpop.f32.mrf.mxu0
        %v466 = vadd.f32 %v432, %v465
        %v467 = vpop.f32.mrf.mxu0
        %468 = vdwg.mxu0
        %v473 = vunpack.c.l.b16 %v416
        %v474 = vunpack.c.l.b16 %v417
        %v475 = vunpack.c.l.b16 %v418
        %v476 = vunpack.c.l.b16 %v419
        %v477 = vpack.c.b16 %v474, %v473
        %v478 = vpack.c.b16 %v476, %v475
        %481 = vmatpush.bf16.msra.mxu0 0
        %482 = vmatpush.bf16.msra.mxu0 0
        %483 = vmatpush.bf16.msra.mxu0 0
        %484 = vmatpush.bf16.msra.mxu0 0
        %485 = vmatpush.bf16.msra.mxu0 0
        %486 = vmatpush.bf16.msra.mxu0 0
        %487 = vmatpush.bf16.msra.mxu0 %v478
        %488 = vmatpush.bf16.msra.mxu0 %v477
        %489 = vmatmul.bf16.gmra.mxu0 %v454
        %v490 = vpop.f32.mrf.mxu0
        %v491 = vadd.f32 %v433, %v490
        %v492 = vpop.f32.mrf.mxu0
        %493 = vdwg.mxu0
        %v498 = vunpack.c.l.b16 %v420
        %v499 = vunpack.c.l.b16 %v421
        %v500 = vunpack.c.l.b16 %v422
        %v501 = vunpack.c.l.b16 %v423
        %v502 = vpack.c.b16 %v499, %v498
        %v503 = vpack.c.b16 %v501, %v500
        %506 = vmatpush.bf16.msra.mxu0 0
        %507 = vmatpush.bf16.msra.mxu0 0
        %508 = vmatpush.bf16.msra.mxu0 0
        %509 = vmatpush.bf16.msra.mxu0 0
        %510 = vmatpush.bf16.msra.mxu0 0
        %511 = vmatpush.bf16.msra.mxu0 0
        %512 = vmatpush.bf16.msra.mxu0 %v503
        %513 = vmatpush.bf16.msra.mxu0 %v502
        %514 = vmatmul.bf16.gmra.mxu0 %v454
        %v515 = vpop.f32.mrf.mxu0
        %v516 = vadd.f32 %v434, %v515
        %v517 = vpop.f32.mrf.mxu0
        %518 = vdwg.mxu0
        %v523 = vunpack.c.l.b16 %v424
        %v524 = vunpack.c.l.b16 %v425
        %v525 = vunpack.c.l.b16 %v426
        %v526 = vunpack.c.l.b16 %v427
        %v527 = vpack.c.b16 %v524, %v523
        %v528 = vpack.c.b16 %v526, %v525
        %531 = vmatpush.bf16.msra.mxu0 0
        %532 = vmatpush.bf16.msra.mxu0 0
        %533 = vmatpush.bf16.msra.mxu0 0
        %534 = vmatpush.bf16.msra.mxu0 0
        %535 = vmatpush.bf16.msra.mxu0 0
        %536 = vmatpush.bf16.msra.mxu0 0
        %537 = vmatpush.bf16.msra.mxu0 %v528
        %538 = vmatpush.bf16.msra.mxu0 %v527
        %539 = vmatmul.bf16.gmra.mxu0 %v454
        %v540 = vpop.f32.mrf.mxu0
        %v541 = vadd.f32 %v435, %v540
        %v542 = vpop.f32.mrf.mxu0
        %543 = vdwg.mxu0
        %v544 = vld [vmem:[%s4] sm:$0xf]
        %v545 = vld [vmem:[%s4 + $0x4] sm:$0xf]
        %v546 = vld [vmem:[%s4 + $0x8] sm:$0xf]
        %v547 = vld [vmem:[%s4 + $0xc] sm:$0xf]
        %v548 = vld [vmem:[%s4 + $0x10] sm:$0xf]
        %v549 = vld [vmem:[%s4 + $0x14] sm:$0xf]
        %v550 = vld [vmem:[%s4 + $0x18] sm:$0xf]
        %v551 = vld [vmem:[%s4 + $0x1c] sm:$0xf]
        %v552 = vld [vmem:[%s4 + $0x20] sm:$0xf]
        %v553 = vld [vmem:[%s4 + $0x24] sm:$0xf]
        %v554 = vld [vmem:[%s4 + $0x28] sm:$0xf]
        %v555 = vld [vmem:[%s4 + $0x2c] sm:$0xf]
        %v556 = vld [vmem:[%s4 + $0x30] sm:$0xf]
        %v557 = vld [vmem:[%s4 + $0x34] sm:$0xf]
        %v558 = vld [vmem:[%s4 + $0x38] sm:$0xf]
        %v559 = vld [vmem:[%s4 + $0x3c] sm:$0xf]
        %v564 = vunpack.c.l.b16 %v544
        %v565 = vunpack.c.l.b16 %v545
        %v566 = vunpack.c.l.b16 %v546
        %v567 = vunpack.c.l.b16 %v547
        %v568 = vpack.c.b16 %v565, %v564
        %v569 = vpack.c.b16 %v567, %v566
        %572 = vrot.lane.b32.xlu0 %v432, 120
        %v573 = vpop.permute.xlu0 %572
        %v576 = vsel %vm452, %v409, 0
        %578 = vmatpush.bf16.msra.mxu0 0
        %579 = vmatpush.bf16.msra.mxu0 0
        %580 = vmatpush.bf16.msra.mxu0 0
        %581 = vmatpush.bf16.msra.mxu0 0
        %582 = vmatpush.bf16.msra.mxu0 0
        %583 = vmatpush.bf16.msra.mxu0 0
        %584 = vmatpush.bf16.msra.mxu0 %v569
        %585 = vmatpush.bf16.msra.mxu0 %v568
        %586 = vmatmul.bf16.gmra.mxu0 %v576
        %v587 = vpop.f32.mrf.mxu0
        %v588 = vadd.f32 %v573, %v587
        %v589 = vpop.f32.mrf.mxu0
        %590 = vdwg.mxu0
        %v595 = vunpack.c.l.b16 %v548
        %v596 = vunpack.c.l.b16 %v549
        %v597 = vunpack.c.l.b16 %v550
        %v598 = vunpack.c.l.b16 %v551
        %v599 = vpack.c.b16 %v596, %v595
        %v600 = vpack.c.b16 %v598, %v597
        %603 = vrot.lane.b32.xlu0 %v433, 120
        %v604 = vpop.permute.xlu0 %603
        %606 = vmatpush.bf16.msra.mxu0 0
        %607 = vmatpush.bf16.msra.mxu0 0
        %608 = vmatpush.bf16.msra.mxu0 0
        %609 = vmatpush.bf16.msra.mxu0 0
        %610 = vmatpush.bf16.msra.mxu0 0
        %611 = vmatpush.bf16.msra.mxu0 0
        %612 = vmatpush.bf16.msra.mxu0 %v600
        %613 = vmatpush.bf16.msra.mxu0 %v599
        %614 = vmatmul.bf16.gmra.mxu0 %v576
        %v615 = vpop.f32.mrf.mxu0
        %v616 = vadd.f32 %v604, %v615
        %v617 = vpop.f32.mrf.mxu0
        %618 = vdwg.mxu0
        %v623 = vunpack.c.l.b16 %v552
        %v624 = vunpack.c.l.b16 %v553
        %v625 = vunpack.c.l.b16 %v554
        %v626 = vunpack.c.l.b16 %v555
        %v627 = vpack.c.b16 %v624, %v623
        %v628 = vpack.c.b16 %v626, %v625
        %631 = vrot.lane.b32.xlu0 %v434, 120
        %v632 = vpop.permute.xlu0 %631
        %634 = vmatpush.bf16.msra.mxu0 0
        %635 = vmatpush.bf16.msra.mxu0 0
        %636 = vmatpush.bf16.msra.mxu0 0
        %637 = vmatpush.bf16.msra.mxu0 0
        %638 = vmatpush.bf16.msra.mxu0 0
        %639 = vmatpush.bf16.msra.mxu0 0
        %640 = vmatpush.bf16.msra.mxu0 %v628
        %641 = vmatpush.bf16.msra.mxu0 %v627
        %642 = vmatmul.bf16.gmra.mxu0 %v576
        %v643 = vpop.f32.mrf.mxu0
        %v644 = vadd.f32 %v632, %v643
        %v645 = vpop.f32.mrf.mxu0
        %646 = vdwg.mxu0
        %v651 = vunpack.c.l.b16 %v556
        %v652 = vunpack.c.l.b16 %v557
        %v653 = vunpack.c.l.b16 %v558
        %v654 = vunpack.c.l.b16 %v559
        %v655 = vpack.c.b16 %v652, %v651
        %v656 = vpack.c.b16 %v654, %v653
        %659 = vrot.lane.b32.xlu0 %v435, 120
        %v660 = vpop.permute.xlu0 %659
        %662 = vmatpush.bf16.msra.mxu0 0
        %663 = vmatpush.bf16.msra.mxu0 0
        %664 = vmatpush.bf16.msra.mxu0 0
        %665 = vmatpush.bf16.msra.mxu0 0
        %666 = vmatpush.bf16.msra.mxu0 0
        %667 = vmatpush.bf16.msra.mxu0 0
        %668 = vmatpush.bf16.msra.mxu0 %v656
        %669 = vmatpush.bf16.msra.mxu0 %v655
        %670 = vmatmul.bf16.gmra.mxu0 %v576
        %v671 = vpop.f32.mrf.mxu0
        %v672 = vadd.f32 %v660, %v671
        %v673 = vpop.f32.mrf.mxu0
        %674 = vdwg.mxu0
        %v675 = vpack.c.bf16 %v466, %v466
        %v676 = vpack.c.bf16 %v491, %v491
        %v677 = vpack.c.bf16 %v516, %v516
        %v678 = vpack.c.bf16 %v541, %v541
        %v679 = vpack.c.bf16 %v588, %v588
        %v680 = vpack.c.bf16 %v616, %v616
        %v681 = vpack.c.bf16 %v644, %v644
        %v682 = vpack.c.bf16 %v672, %v672
        %vm683 = vcmask 64512
        %v685 = vsel %vm683, %v675, 0
        %v688 = vsel %vm683, %v679, 0
        %690 = vmatpush.bf16.xpose.msra.mxu0 0
        %691 = vmatpush.bf16.xpose.msra.mxu0 0
        %692 = vmatpush.bf16.xpose.msra.mxu0 0
        %693 = vmatpush.bf16.xpose.msra.mxu0 0
        %694 = vmatpush.bf16.xpose.msra.mxu0 0
        %695 = vmatpush.bf16.xpose.msra.mxu0 0
        %696 = vmatpush.bf16.xpose.msra.mxu0 0
        %697 = vmatpush.bf16.xpose.msra.mxu0 %v688
        %698 = vmatmul.bf16.gmra.mxu0 %v685
        %v699 = vpop.f32.mrf.mxu0
        %v700 = vadd.f32 0.0, %v699
        %v701 = vpop.f32.mrf.mxu0
        %702 = vdwg.mxu0
        %v704 = vsel %vm683, %v676, 0
        %v707 = vsel %vm683, %v680, 0
        %709 = vmatpush.bf16.xpose.msra.mxu0 0
        %710 = vmatpush.bf16.xpose.msra.mxu0 0
        %711 = vmatpush.bf16.xpose.msra.mxu0 0
        %712 = vmatpush.bf16.xpose.msra.mxu0 0
        %713 = vmatpush.bf16.xpose.msra.mxu0 0
        %714 = vmatpush.bf16.xpose.msra.mxu0 0
        %715 = vmatpush.bf16.xpose.msra.mxu0 0
        %716 = vmatpush.bf16.xpose.msra.mxu0 %v707
        %717 = vmatmul.bf16.gmra.mxu0 %v704
        %v718 = vpop.f32.mrf.mxu0
        %v719 = vadd.f32 0.0, %v718
        %v720 = vpop.f32.mrf.mxu0
        %721 = vdwg.mxu0
        %v723 = vsel %vm683, %v677, 0
        %v726 = vsel %vm683, %v681, 0
        %728 = vmatpush.bf16.xpose.msra.mxu0 0
        %729 = vmatpush.bf16.xpose.msra.mxu0 0
        %730 = vmatpush.bf16.xpose.msra.mxu0 0
        %731 = vmatpush.bf16.xpose.msra.mxu0 0
        %732 = vmatpush.bf16.xpose.msra.mxu0 0
        %733 = vmatpush.bf16.xpose.msra.mxu0 0
        %734 = vmatpush.bf16.xpose.msra.mxu0 0
        %735 = vmatpush.bf16.xpose.msra.mxu0 %v726
        %736 = vmatmul.bf16.gmra.mxu0 %v723
        %v737 = vpop.f32.mrf.mxu0
        %v738 = vadd.f32 0.0, %v737
        %v739 = vpop.f32.mrf.mxu0
        %740 = vdwg.mxu0
        %v742 = vsel %vm683, %v678, 0
        %v745 = vsel %vm683, %v682, 0
        %747 = vmatpush.bf16.xpose.msra.mxu0 0
        %748 = vmatpush.bf16.xpose.msra.mxu0 0
        %749 = vmatpush.bf16.xpose.msra.mxu0 0
        %750 = vmatpush.bf16.xpose.msra.mxu0 0
        %751 = vmatpush.bf16.xpose.msra.mxu0 0
        %752 = vmatpush.bf16.xpose.msra.mxu0 0
        %753 = vmatpush.bf16.xpose.msra.mxu0 0
        %754 = vmatpush.bf16.xpose.msra.mxu0 %v745
        %755 = vmatmul.bf16.gmra.mxu0 %v742
        %v756 = vpop.f32.mrf.mxu0
        %v757 = vadd.f32 0.0, %v756
        %v758 = vpop.f32.mrf.mxu0
        %759 = vdwg.mxu0
        %v760 = vmul.f32 %v700, 0.35355338
        %v761 = vmul.f32 %v719, 0.35355338
        %v762 = vmul.f32 %v738, 0.35355338
        %v763 = vmul.f32 %v757, 0.35355338
        %v764 = vsel %vm683, %v760, -inf
        %765 = vmax.xlane.f32.xlu0 %v764
        %v766 = vpop.xlane.xlu0 %765
        %v767 = vsel %vm683, %v761, -inf
        %768 = vmax.xlane.f32.xlu0 %v767
        %v769 = vpop.xlane.xlu0 %768
        %v770 = vsel %vm683, %v762, -inf
        %771 = vmax.xlane.f32.xlu0 %v770
        %v772 = vpop.xlane.xlu0 %771
        %v773 = vsel %vm683, %v763, -inf
        %774 = vmax.xlane.f32.xlu0 %v773
        %v775 = vpop.xlane.xlu0 %774
        %v776 = vsub.f32 %v760, %v766
        %v777 = vsub.f32 %v761, %v769
        %v778 = vsub.f32 %v762, %v772
        %v779 = vsub.f32 %v763, %v775
        %v780 = vmul.f32 %v776, 1.442695
        %v781 = vpow.pop %v780
        %v782 = vmul.f32 %v777, 1.442695
        %v783 = vpow.pop %v782
        %v784 = vmul.f32 %v778, 1.442695
        %v785 = vpow.pop %v784
        %v786 = vmul.f32 %v779, 1.442695
        %v787 = vpow.pop %v786
        %v788 = vsel %vm683, %v781, 0.0
        %789 = vadd.xlane.f32.xlu0 %v788
        %v790 = vpop.xlane.xlu0 %789
        %v791 = vsel %vm683, %v783, 0.0
        %792 = vadd.xlane.f32.xlu0 %v791
        %v793 = vpop.xlane.xlu0 %792
        %v794 = vsel %vm683, %v785, 0.0
        %795 = vadd.xlane.f32.xlu0 %v794
        %v796 = vpop.xlane.xlu0 %795
        %v797 = vsel %vm683, %v787, 0.0
        %798 = vadd.xlane.f32.xlu0 %v797
        %v799 = vpop.xlane.xlu0 %798
        %v800 = vrcp.pop %v790
        %v801 = vmul.f32 %v790, %v800
        %v802 = vsub.f32 1.0, %v801
        %v803 = vmul.f32 %v800, %v802
        %v804 = vadd.f32 %v800, %v803
        %vm805 = vweird.f32 %v790
        %vm806 = vweird.f32 %v800
        %vm807 = vmor %vm805, %vm806
        %v808 = vsel %vm807, %v800, %v804
        %v809 = vand.u32 2147483647, %v790
        %vm810 = vcmp.eq.f32.partialorder %v809, 8.507059e+37
        %v811 = vand.u32 %v790, 2147483648
        %v812 = vor.u32 1.1754944e-38, %v811
        %v813 = vsel %vm810, %v812, %v808
        %v814 = vmul.f32 %v781, %v813
        %v815 = vrcp.pop %v793
        %v816 = vmul.f32 %v793, %v815
        %v817 = vsub.f32 1.0, %v816
        %v818 = vmul.f32 %v815, %v817
        %v819 = vadd.f32 %v815, %v818
        %vm820 = vweird.f32 %v793
        %vm821 = vweird.f32 %v815
        %vm822 = vmor %vm820, %vm821
        %v823 = vsel %vm822, %v815, %v819
        %v824 = vand.u32 2147483647, %v793
        %vm825 = vcmp.eq.f32.partialorder %v824, 8.507059e+37
        %v826 = vand.u32 %v793, 2147483648
        %v827 = vor.u32 1.1754944e-38, %v826
        %v828 = vsel %vm825, %v827, %v823
        %v829 = vmul.f32 %v783, %v828
        %v830 = vrcp.pop %v796
        %v831 = vmul.f32 %v796, %v830
        %v832 = vsub.f32 1.0, %v831
        %v833 = vmul.f32 %v830, %v832
        %v834 = vadd.f32 %v830, %v833
        %vm835 = vweird.f32 %v796
        %vm836 = vweird.f32 %v830
        %vm837 = vmor %vm835, %vm836
        %v838 = vsel %vm837, %v830, %v834
        %v839 = vand.u32 2147483647, %v796
        %vm840 = vcmp.eq.f32.partialorder %v839, 8.507059e+37
        %v841 = vand.u32 %v796, 2147483648
        %v842 = vor.u32 1.1754944e-38, %v841
        %v843 = vsel %vm840, %v842, %v838
        %v844 = vmul.f32 %v785, %v843
        %v845 = vrcp.pop %v799
        %v846 = vmul.f32 %v799, %v845
        %v847 = vsub.f32 1.0, %v846
        %v848 = vmul.f32 %v845, %v847
        %v849 = vadd.f32 %v845, %v848
        %vm850 = vweird.f32 %v799
        %vm851 = vweird.f32 %v845
        %vm852 = vmor %vm850, %vm851
        %v853 = vsel %vm852, %v845, %v849
        %v854 = vand.u32 2147483647, %v799
        %vm855 = vcmp.eq.f32.partialorder %v854, 8.507059e+37
        %v856 = vand.u32 %v799, 2147483648
        %v857 = vor.u32 1.1754944e-38, %v856
        %v858 = vsel %vm855, %v857, %v853
        %v859 = vmul.f32 %v787, %v858
        %v860 = vpack.c.bf16 %v814, %v814
        %v861 = vpack.c.bf16 %v829, %v829
        %v862 = vpack.c.bf16 %v844, %v844
        %v863 = vpack.c.bf16 %v859, %v859
        %v865 = vunpack.c.l.b16 %v679
        %v866 = vpack.c.b16 %v865, %v865
        %867 = vrot.lane.b32.xlu0 %v866, 120
        %v868 = vpop.permute.xlu0 %867
        %v870 = vsel %vm683, %v860, 0
        %vm872 = vcmask 1043456
        %v874 = vsel %vm872, %v868, 0
        %876 = vmatpush.bf16.msra.mxu0 0
        %877 = vmatpush.bf16.msra.mxu0 0
        %878 = vmatpush.bf16.msra.mxu0 0
        %879 = vmatpush.bf16.msra.mxu0 0
        %880 = vmatpush.bf16.msra.mxu0 0
        %881 = vmatpush.bf16.msra.mxu0 0
        %882 = vmatpush.bf16.msra.mxu0 0
        %883 = vmatpush.bf16.msra.mxu0 %v874
        %884 = vmatmul.bf16.gmra.mxu0 %v870
        %v885 = vpop.f32.mrf.mxu0
        %v886 = vadd.f32 0.0, %v885
        %v887 = vpop.f32.mrf.mxu0
        %888 = vdwg.mxu0
        %v890 = vunpack.c.l.b16 %v680
        %v891 = vpack.c.b16 %v890, %v890
        %892 = vrot.lane.b32.xlu0 %v891, 120
        %v893 = vpop.permute.xlu0 %892
        %v895 = vsel %vm683, %v861, 0
        %v898 = vsel %vm872, %v893, 0
        %900 = vmatpush.bf16.msra.mxu0 0
        %901 = vmatpush.bf16.msra.mxu0 0
        %902 = vmatpush.bf16.msra.mxu0 0
        %903 = vmatpush.bf16.msra.mxu0 0
        %904 = vmatpush.bf16.msra.mxu0 0
        %905 = vmatpush.bf16.msra.mxu0 0
        %906 = vmatpush.bf16.msra.mxu0 0
        %907 = vmatpush.bf16.msra.mxu0 %v898
        %908 = vmatmul.bf16.gmra.mxu0 %v895
        %v909 = vpop.f32.mrf.mxu0
        %v910 = vadd.f32 0.0, %v909
        %v911 = vpop.f32.mrf.mxu0
        %912 = vdwg.mxu0
        %v914 = vunpack.c.l.b16 %v681
        %v915 = vpack.c.b16 %v914, %v914
        %916 = vrot.lane.b32.xlu0 %v915, 120
        %v917 = vpop.permute.xlu0 %916
        %v919 = vsel %vm683, %v862, 0
        %v922 = vsel %vm872, %v917, 0
        %924 = vmatpush.bf16.msra.mxu0 0
        %925 = vmatpush.bf16.msra.mxu0 0
        %926 = vmatpush.bf16.msra.mxu0 0
        %927 = vmatpush.bf16.msra.mxu0 0
        %928 = vmatpush.bf16.msra.mxu0 0
        %929 = vmatpush.bf16.msra.mxu0 0
        %930 = vmatpush.bf16.msra.mxu0 0
        %931 = vmatpush.bf16.msra.mxu0 %v922
        %932 = vmatmul.bf16.gmra.mxu0 %v919
        %v933 = vpop.f32.mrf.mxu0
        %v934 = vadd.f32 0.0, %v933
        %v935 = vpop.f32.mrf.mxu0
        %936 = vdwg.mxu0
        %v938 = vunpack.c.l.b16 %v682
        %v939 = vpack.c.b16 %v938, %v938
        %940 = vrot.lane.b32.xlu0 %v939, 120
        %v941 = vpop.permute.xlu0 %940
        %v943 = vsel %vm683, %v863, 0
        %v946 = vsel %vm872, %v941, 0
        %948 = vmatpush.bf16.msra.mxu0 0
        %949 = vmatpush.bf16.msra.mxu0 0
        %950 = vmatpush.bf16.msra.mxu0 0
        %951 = vmatpush.bf16.msra.mxu0 0
        %952 = vmatpush.bf16.msra.mxu0 0
        %953 = vmatpush.bf16.msra.mxu0 0
        %954 = vmatpush.bf16.msra.mxu0 0
        %955 = vmatpush.bf16.msra.mxu0 %v946
        %956 = vmatmul.bf16.gmra.mxu0 %v943
        %v957 = vpop.f32.mrf.mxu0
        %v958 = vadd.f32 0.0, %v957
        %v959 = vpop.f32.mrf.mxu0
        %960 = vdwg.mxu0
        %v961 = vld [vmem:[%s7 + $0x4] sm:$0x1]
        %v962 = vpack.c.bf16 %v886, %v886
        %v963 = vpack.c.bf16 %v910, %v910
        %v964 = vpack.c.bf16 %v934, %v934
        %v965 = vpack.c.bf16 %v958, %v958
        %v966 = vld [vmem:[%s5] sm:$0xf]
        %v967 = vld [vmem:[%s5 + $0x4] sm:$0xf]
        %v968 = vld [vmem:[%s5 + $0x8] sm:$0xf]
        %v969 = vld [vmem:[%s5 + $0xc] sm:$0xf]
        %v971 = vsel %vm683, %v962, 0
        %v974 = vsel %vm872, %v966, 0
        %976 = vmatpush.bf16.msra.mxu0 0
        %977 = vmatpush.bf16.msra.mxu0 0
        %978 = vmatpush.bf16.msra.mxu0 0
        %979 = vmatpush.bf16.msra.mxu0 0
        %980 = vmatpush.bf16.msra.mxu0 0
        %981 = vmatpush.bf16.msra.mxu0 0
        %982 = vmatpush.bf16.msra.mxu0 0
        %983 = vmatpush.bf16.msra.mxu0 %v974
        %984 = vmatmul.bf16.gmra.mxu0 %v971
        %v985 = vpop.f32.mrf.mxu0
        %v986 = vadd.f32 0.0, %v985
        %v987 = vpop.f32.mrf.mxu0
        %988 = vdwg.mxu0
        %v990 = vsel %vm683, %v963, 0
        %v993 = vsel %vm872, %v967, 0
        %995 = vmatpush.bf16.msra.mxu0 0
        %996 = vmatpush.bf16.msra.mxu0 0
        %997 = vmatpush.bf16.msra.mxu0 0
        %998 = vmatpush.bf16.msra.mxu0 0
        %999 = vmatpush.bf16.msra.mxu0 0
        %1000 = vmatpush.bf16.msra.mxu0 0
        %1001 = vmatpush.bf16.msra.mxu0 0
        %1002 = vmatpush.bf16.msra.mxu0 %v993
        %1003 = vmatmul.bf16.gmra.mxu0 %v990
        %v1004 = vpop.f32.mrf.mxu0
        %v1005 = vadd.f32 0.0, %v1004
        %v1006 = vpop.f32.mrf.mxu0
        %1007 = vdwg.mxu0
        %v1009 = vsel %vm683, %v964, 0
        %v1012 = vsel %vm872, %v968, 0
        %1014 = vmatpush.bf16.msra.mxu0 0
        %1015 = vmatpush.bf16.msra.mxu0 0
        %1016 = vmatpush.bf16.msra.mxu0 0
        %1017 = vmatpush.bf16.msra.mxu0 0
        %1018 = vmatpush.bf16.msra.mxu0 0
        %1019 = vmatpush.bf16.msra.mxu0 0
        %1020 = vmatpush.bf16.msra.mxu0 0
        %1021 = vmatpush.bf16.msra.mxu0 %v1012
        %1022 = vmatmul.bf16.gmra.mxu0 %v1009
        %v1023 = vpop.f32.mrf.mxu0
        %v1024 = vadd.f32 0.0, %v1023
        %v1025 = vpop.f32.mrf.mxu0
        %1026 = vdwg.mxu0
        %v1028 = vsel %vm683, %v965, 0
        %v1031 = vsel %vm872, %v969, 0
        %1033 = vmatpush.bf16.msra.mxu0 0
        %1034 = vmatpush.bf16.msra.mxu0 0
        %1035 = vmatpush.bf16.msra.mxu0 0
        %1036 = vmatpush.bf16.msra.mxu0 0
        %1037 = vmatpush.bf16.msra.mxu0 0
        %1038 = vmatpush.bf16.msra.mxu0 0
        %1039 = vmatpush.bf16.msra.mxu0 0
        %1040 = vmatpush.bf16.msra.mxu0 %v1031
        %1041 = vmatmul.bf16.gmra.mxu0 %v1028
        %v1042 = vpop.f32.mrf.mxu0
        %v1043 = vadd.f32 0.0, %v1042
        %v1044 = vpop.f32.mrf.mxu0
        %1045 = vdwg.mxu0
        %v1046 = vsel %vm452, %v986, 0.0
        %v1047 = vsel %vm452, %v1005, 0.0
        %v1048 = vadd.f32 %v1046, %v1047
        %v1049 = vsel %vm452, %v1024, 0.0
        %v1050 = vadd.f32 %v1048, %v1049
        %v1051 = vsel %vm452, %v1043, 0.0
        %v1052 = vadd.f32 %v1050, %v1051
        %v1053 = vperm.slane %v961, 0
        %v1054 = vadd.f32 %v1052, %v1053
        %v1055 = vld [vmem:[%s6] sm:$0xf]
        %v1056 = vld [vmem:[%s6 + $0x4] sm:$0xf]
        %v1057 = vld [vmem:[%s6 + $0x8] sm:$0xf]
        %v1058 = vld [vmem:[%s6 + $0xc] sm:$0xf]
        %v1059 = vld [vmem:[%s6 + $0x10] sm:$0xf]
        %v1060 = vld [vmem:[%s6 + $0x14] sm:$0xf]
        %v1061 = vld [vmem:[%s6 + $0x18] sm:$0xf]
        %v1062 = vld [vmem:[%s6 + $0x1c] sm:$0xf]
        %v1063 = vld [vmem:[%s7 + $0x5] sm:$0x1]
        %v1064 = vld [vmem:[%s7 + $0x6] sm:$0x1]
        %v1065 = vpack.c.bf16 %v1054, %v1054
        %v1066 = vperm.slane %v1063, 0
        %v1071 = vunpack.c.l.b16 %v1055
        %v1072 = vunpack.c.l.b16 %v1056
        %v1073 = vunpack.c.l.b16 %v1057
        %v1074 = vunpack.c.l.b16 %v1058
        %v1075 = vpack.c.b16 %v1072, %v1071
        %v1076 = vpack.c.b16 %v1074, %v1073
        %v1080 = vsel %vm452, %v1065, 0
        %1082 = vmatpush.bf16.msra.mxu0 0
        %1083 = vmatpush.bf16.msra.mxu0 0
        %1084 = vmatpush.bf16.msra.mxu0 0
        %1085 = vmatpush.bf16.msra.mxu0 0
        %1086 = vmatpush.bf16.msra.mxu0 0
        %1087 = vmatpush.bf16.msra.mxu0 0
        %1088 = vmatpush.bf16.msra.mxu0 %v1076
        %1089 = vmatpush.bf16.msra.mxu0 %v1075
        %1090 = vmatmul.bf16.gmra.mxu0 %v1080
        %v1091 = vpop.f32.mrf.mxu0
        %v1092 = vadd.f32 %v1066, %v1091
        %v1093 = vpop.f32.mrf.mxu0
        %1094 = vdwg.mxu0
        %v1095 = vpack.c.bf16 %v410, %v410
        %v1096 = vperm.slane %v1064, 0
        %v1101 = vunpack.c.l.b16 %v1059
        %v1102 = vunpack.c.l.b16 %v1060
        %v1103 = vunpack.c.l.b16 %v1061
        %v1104 = vunpack.c.l.b16 %v1062
        %v1105 = vpack.c.b16 %v1102, %v1101
        %v1106 = vpack.c.b16 %v1104, %v1103
        %v1110 = vsel %vm452, %v1095, 0
        %1112 = vmatpush.bf16.msra.mxu0 0
        %1113 = vmatpush.bf16.msra.mxu0 0
        %1114 = vmatpush.bf16.msra.mxu0 0
        %1115 = vmatpush.bf16.msra.mxu0 0
        %1116 = vmatpush.bf16.msra.mxu0 0
        %1117 = vmatpush.bf16.msra.mxu0 0
        %1118 = vmatpush.bf16.msra.mxu0 %v1106
        %1119 = vmatpush.bf16.msra.mxu0 %v1105
        %1120 = vmatmul.bf16.gmra.mxu0 %v1110
        %v1121 = vpop.f32.mrf.mxu0
        %v1122 = vadd.f32 %v1096, %v1121
        %v1123 = vpop.f32.mrf.mxu0
        %1124 = vdwg.mxu0
        %v1125 = vadd.f32 %v1092, %v1122
        %v1126 = vxor.u32 %v1125, 2147483648
        %v1127 = vmul.f32 %v1126, 1.442695
        %v1128 = vpow.pop %v1127
        %v1129 = vadd.f32 %v1128, 1.0
        %v1130 = vrcp.pop %v1129
        %v1131 = vmul.f32 %v1129, %v1130
        %v1132 = vsub.f32 1.0, %v1131
        %v1133 = vmul.f32 %v1130, %v1132
        %v1134 = vadd.f32 %v1130, %v1133
        %vm1135 = vweird.f32 %v1129
        %vm1136 = vweird.f32 %v1130
        %vm1137 = vmor %vm1135, %vm1136
        %v1138 = vsel %vm1137, %v1130, %v1134
        %v1139 = vand.u32 2147483647, %v1129
        %vm1140 = vcmp.eq.f32.partialorder %v1139, 8.507059e+37
        %v1141 = vand.u32 %v1129, 2147483648
        %v1142 = vor.u32 1.1754944e-38, %v1141
        %v1143 = vsel %vm1140, %v1142, %v1138
        %v1144 = vmul.f32 1.0, %v1143
        %1146 = vrot.lane.b32.xlu0 %v1122, 64
        %v1147 = vpop.permute.xlu0 %1146
        %v1149 = vmul.f32 %v1144, %v1147
        %1151 = vrot.lane.b32.xlu0 %v1149, 64
        %v1152 = vpop.permute.xlu0 %1151
        %v1154 = vadd.f32 %v1092, %v1152
        %v1155 = vtanh.pop %v1154
        %v1156 = vsub.f32 1.0, %v1144
        %1158 = vrot.lane.b32.xlu0 %v1155, 96
        %v1159 = vpop.permute.xlu0 %1158
        %v1161 = vmul.f32 %v1156, %v1159
        %1163 = vrot.lane.b32.xlu0 %v410, 32
        %v1164 = vpop.permute.xlu0 %1163
        %v1166 = vmul.f32 %v1144, %v1164
        %v1167 = vadd.f32 %v1161, %v1166
        %1169 = vrot.lane.b32.xlu0 %v1167, 96
        %v1170 = vpop.permute.xlu0 %1169
        %1172 = vst.msk [vmem:[#allocation2] sm:$0xff] %vm452, %v1170
        %v1173 = vld [vmem:[%s6 + $0x20] sm:$0xf]
        %v1174 = vld [vmem:[%s6 + $0x24] sm:$0xf]
        %v1175 = vld [vmem:[%s6 + $0x28] sm:$0xf]
        %v1176 = vld [vmem:[%s6 + $0x2c] sm:$0xf]
        %v1177 = vld [vmem:[%s6 + $0x30] sm:$0xf]
        %v1178 = vld [vmem:[%s6 + $0x34] sm:$0xf]
        %v1179 = vld [vmem:[%s6 + $0x38] sm:$0xf]
        %v1180 = vld [vmem:[%s6 + $0x3c] sm:$0xf]
        %v1181 = vld [vmem:[%s6 + $0x40] sm:$0xf]
        %v1182 = vld [vmem:[%s6 + $0x44] sm:$0xf]
        %v1183 = vld [vmem:[%s6 + $0x48] sm:$0xf]
        %v1184 = vld [vmem:[%s6 + $0x4c] sm:$0xf]
        %v1185 = vld [vmem:[%s6 + $0x50] sm:$0xf]
        %v1186 = vld [vmem:[%s6 + $0x54] sm:$0xf]
        %v1187 = vld [vmem:[%s6 + $0x58] sm:$0xf]
        %v1188 = vld [vmem:[%s6 + $0x5c] sm:$0xf]
        %v1189 = vld [vmem:[%s6 + $0x60] sm:$0xf]
        %v1190 = vld [vmem:[%s6 + $0x64] sm:$0xf]
        %v1191 = vld [vmem:[%s6 + $0x68] sm:$0xf]
        %v1192 = vld [vmem:[%s6 + $0x6c] sm:$0xf]
        %v1193 = vld [vmem:[%s6 + $0x70] sm:$0xf]
        %v1194 = vld [vmem:[%s6 + $0x74] sm:$0xf]
        %v1195 = vld [vmem:[%s6 + $0x78] sm:$0xf]
        %v1196 = vld [vmem:[%s6 + $0x7c] sm:$0xf]
        %v1197 = vld [vmem:[%s7 + $0x7] sm:$0x1]
        %v1198 = vld [vmem:[%s7 + $0x8] sm:$0x1]
        %v1199 = vld [vmem:[%s7 + $0x9] sm:$0x1]
        %v1200 = vld [vmem:[%s7 + $0xa] sm:$0x1]
        %v1201 = vpack.c.bf16 %v1167, %v1167
        %v1202 = vperm.slane %v1197, 0
        %1204 = vrot.lane.b32.xlu0 %v1201, 96
        %v1205 = vpop.permute.xlu0 %1204
        %v1210 = vunpack.c.l.b16 %v1173
        %v1211 = vunpack.c.l.b16 %v1174
        %v1212 = vunpack.c.l.b16 %v1175
        %v1213 = vunpack.c.l.b16 %v1176
        %v1214 = vpack.c.b16 %v1211, %v1210
        %v1215 = vpack.c.b16 %v1213, %v1212
        %v1219 = vsel %vm452, %v1205, 0
        %1221 = vmatpush.bf16.msra.mxu0 0
        %1222 = vmatpush.bf16.msra.mxu0 0
        %1223 = vmatpush.bf16.msra.mxu0 0
        %1224 = vmatpush.bf16.msra.mxu0 0
        %1225 = vmatpush.bf16.msra.mxu0 0
        %1226 = vmatpush.bf16.msra.mxu0 0
        %1227 = vmatpush.bf16.msra.mxu0 %v1215
        %1228 = vmatpush.bf16.msra.mxu0 %v1214
        %1229 = vmatmul.bf16.gmra.mxu0 %v1219
        %v1230 = vpop.f32.mrf.mxu0
        %v1231 = vadd.f32 %v1202, %v1230
        %v1232 = vpop.f32.mrf.mxu0
        %1233 = vdwg.mxu0
        %v1234 = vmax.f32 %v1231, 0.0
        %v1235 = vpack.c.bf16 %v1234, %v1234
        %v1236 = vperm.slane %v1198, 0
        %v1241 = vunpack.c.l.b16 %v1177
        %v1242 = vunpack.c.l.b16 %v1178
        %v1243 = vunpack.c.l.b16 %v1179
        %v1244 = vunpack.c.l.b16 %v1180
        %v1245 = vpack.c.b16 %v1242, %v1241
        %v1246 = vpack.c.b16 %v1244, %v1243
        %v1250 = vsel %vm452, %v1235, 0
        %1252 = vmatpush.bf16.msra.mxu0 0
        %1253 = vmatpush.bf16.msra.mxu0 0
        %1254 = vmatpush.bf16.msra.mxu0 0
        %1255 = vmatpush.bf16.msra.mxu0 0
        %1256 = vmatpush.bf16.msra.mxu0 0
        %1257 = vmatpush.bf16.msra.mxu0 0
        %1258 = vmatpush.bf16.msra.mxu0 %v1246
        %1259 = vmatpush.bf16.msra.mxu0 %v1245
        %1260 = vmatmul.bf16.gmra.mxu0 %v1250
        %v1261 = vpop.f32.mrf.mxu0
        %v1262 = vadd.f32 %v1236, %v1261
        %v1263 = vpop.f32.mrf.mxu0
        %1264 = vdwg.mxu0
        %v1265 = vmax.f32 %v1262, 0.0
        %v1266 = vpack.c.bf16 %v1265, %v1265
        %v1267 = vperm.slane %v1199, 0
        %v1276 = vunpack.c.l.b16 %v1181
        %v1277 = vunpack.c.l.b16 %v1182
        %v1278 = vunpack.c.l.b16 %v1183
        %v1279 = vunpack.c.l.b16 %v1184
        %v1280 = vunpack.c.l.b16 %v1185
        %v1281 = vunpack.c.l.b16 %v1186
        %v1282 = vunpack.c.l.b16 %v1187
        %v1283 = vunpack.c.l.b16 %v1188
        %v1284 = vpack.c.b16 %v1277, %v1276
        %v1285 = vpack.c.b16 %v1279, %v1278
        %v1286 = vpack.c.b16 %v1281, %v1280
        %v1287 = vpack.c.b16 %v1283, %v1282
        %vm1292 = vcmask 523264
        %v1294 = vsel %vm1292, %v1266, 0
        %1296 = vmatpush.bf16.msra.mxu0 0
        %1297 = vmatpush.bf16.msra.mxu0 0
        %1298 = vmatpush.bf16.msra.mxu0 0
        %1299 = vmatpush.bf16.msra.mxu0 0
        %1300 = vmatpush.bf16.msra.mxu0 %v1287
        %1301 = vmatpush.bf16.msra.mxu0 %v1286
        %1302 = vmatpush.bf16.msra.mxu0 %v1285
        %1303 = vmatpush.bf16.msra.mxu0 %v1284
        %1304 = vmatmul.bf16.gmra.mxu0 %v1294
        %v1305 = vpop.f32.mrf.mxu0
        %v1306 = vadd.f32 %v1267, %v1305
        %v1307 = vpop.f32.mrf.mxu0
        %1308 = vdwg.mxu0
        %v1309 = vmax.f32 %v1306, 0.0
        %v1310 = vpack.c.bf16 %v1309, %v1309
        %v1311 = vperm.slane %v1200, 0
        %v1320 = vunpack.c.l.b16 %v1189
        %v1321 = vunpack.c.l.b16 %v1190
        %v1322 = vunpack.c.l.b16 %v1191
        %v1323 = vunpack.c.l.b16 %v1192
        %v1324 = vunpack.c.l.b16 %v1193
        %v1325 = vunpack.c.l.b16 %v1194
        %v1326 = vunpack.c.l.b16 %v1195
        %v1327 = vunpack.c.l.b16 %v1196
        %v1328 = vpack.c.b16 %v1321, %v1320
        %v1329 = vpack.c.b16 %v1323, %v1322
        %v1330 = vpack.c.b16 %v1325, %v1324
        %v1331 = vpack.c.b16 %v1327, %v1326
        %v1337 = vsel %vm1292, %v1310, 0
        %1339 = vmatpush.bf16.msra.mxu0 0
        %1340 = vmatpush.bf16.msra.mxu0 0
        %1341 = vmatpush.bf16.msra.mxu0 0
        %1342 = vmatpush.bf16.msra.mxu0 0
        %1343 = vmatpush.bf16.msra.mxu0 %v1331
        %1344 = vmatpush.bf16.msra.mxu0 %v1330
        %1345 = vmatpush.bf16.msra.mxu0 %v1329
        %1346 = vmatpush.bf16.msra.mxu0 %v1328
        %1347 = vmatmul.bf16.gmra.mxu0 %v1337
        %v1348 = vpop.f32.mrf.mxu0
        %v1349 = vadd.f32 %v1311, %v1348
        %v1350 = vpop.f32.mrf.mxu0
        %1351 = vdwg.mxu0
        %1353 = vrot.lane.b32.xlu0 %v1349, 32
        %v1354 = vpop.permute.xlu0 %1353
        %v1356 = vsel %vm452, %v1170, %v1354
        %vm1357 = vcmask 392192
        %v1358 = vsel %vm1357, %v1356, 0.0
        %1359 = vst [vmem:[%s377] sm:$0xff] %v1358
        %1360 = vst.msk [vmem:[%s384] sm:$0xff] %vm683, %v814
        %1361 = vst.msk [vmem:[%s384 + $0x8] sm:$0xff] %vm683, %v829
        %1362 = vst.msk [vmem:[%s384 + $0x10] sm:$0xff] %vm683, %v844
        %1363 = vst.msk [vmem:[%s384 + $0x18] sm:$0xff] %vm683, %v859
        %s1364 = sand.u32 %s234, 1
        %s1365 = scalar_lea.sflag [#allocation4], %s1364
        %s1366 = sand.u32 %s234, 1
        %s1367 = smul.addr %s1366, 8
        %s1368 = scalar_lea.vmem [#allocation3], %s1367
        %s1369 = sand.u32 %s262, 1
        %s1370 = scalar_lea.sflag [#allocation6], %s1369
        %s1371 = sand.u32 %s262, 1
        %s1372 = smul.addr %s1371, 32
        %s1373 = scalar_lea.vmem [#allocation5], %s1372
        // Predicated region
        $region57: #{tpu_custom_call.1} parent=51 // pred_check
          %p1374 = pneg %p244
        $region58: #{tpu_custom_call.1} parent=51 // pred_check_branch
          %1376 = sbr.rel (%p1374) target = $region60
        $region59: #{tpu_custom_call.1} parent=51 // pred_region
          %1378 = vsyncadd %s1365, 0
          %s1379 = sadd.s32 %s31, %s32
          %s1380 = smul.addr %s1379, 8
          %s1381 = scalar_lea.hbm %s8, %s1380
          %s1383 = sshll.u32 %s1368, 4
          %s1384 = int_to_ptr.vmem [resolvable:$true] %s1383
          %s1385 = sshll.u32 %s1381, 4
          %s1386 = int_to_ptr.hbm [resolvable:$true] %s1385
          %1388 = dma.vmem_to_hbm [thread:$0]  %s1384, 128, %s1386, %s1365
        $region60: #{tpu_custom_call.1} parent=51 // pred_fallthru
          _
        // Predicated region
        $region61: #{tpu_custom_call.1} parent=51 // pred_check
          %p1389 = pneg %p272
        $region62: #{tpu_custom_call.1} parent=51 // pred_check_branch
          %1391 = sbr.rel (%p1389) target = $region64
        $region63: #{tpu_custom_call.1} parent=51 // pred_region
          %1393 = vsyncadd %s1370, 0
          %s1394 = smul.addr %s32, 4
          %s1395 = sadd.s32 %s31, %s1394
          %s1396 = smul.addr %s1395, 8
          %s1397 = scalar_lea.hbm %s9, %s1396
          %s1398 = sshll.u32 %s1373, 4
          %s1399 = int_to_ptr.vmem [resolvable:$true] %s1398
          %s1400 = sshll.u32 %s1397, 4
          %s1401 = int_to_ptr.hbm [resolvable:$true] %s1400
          %1406 = dma.vmem_to_hbm [thread:$0]  %s1399, 512, %s1401, %s1370, 128, 128, 8
        $region64: #{tpu_custom_call.1} parent=51 // pred_fallthru
          _
      $region52: #{tpu_custom_call.1} parent=5 // pred_fallthru
        _
      %p1407 = scmp.le.s32.totalorder 2, %s22
      // Predicated region
      $region65: #{tpu_custom_call.1} parent=5 // pred_check
        %p1408 = pneg %p1407
      $region66: #{tpu_custom_call.1} parent=5 // pred_check_branch
        %1410 = sbr.rel (%p1408) target = $region68
      $region67: #{tpu_custom_call.1} parent=5 // pred_region
        %s1411 = ssub.s32 %s22, 2
        // Predicated region
        $region69: #{tpu_custom_call.1} parent=67 // pred_check
          %p1412 = pneg %p250
        $region70: #{tpu_custom_call.1} parent=67 // pred_check_branch
          %1414 = sbr.rel (%p1412) target = $region72
        $region71: #{tpu_custom_call.1} parent=67 // pred_region
          %s1415 = sand.u32 %s235, 1
          %s1416 = scalar_lea.sflag [#allocation4], %s1415
          %s1417 = sand.u32 %s235, 1
          %s1418 = smul.addr %s1417, 8
          %s1419 = scalar_lea.vmem [#allocation3], %s1418
          %1421 = dma.done %s1416, 128
        $region72: #{tpu_custom_call.1} parent=67 // pred_fallthru
          _
        // Predicated region
        $region73: #{tpu_custom_call.1} parent=67 // pred_check
          %p1422 = pneg %p278
        $region74: #{tpu_custom_call.1} parent=67 // pred_check_branch
          %1424 = sbr.rel (%p1422) target = $region76
        $region75: #{tpu_custom_call.1} parent=67 // pred_region
          %s1425 = sand.u32 %s263, 1
          %s1426 = scalar_lea.sflag [#allocation6], %s1425
          %s1427 = sand.u32 %s263, 1
          %s1428 = smul.addr %s1427, 32
          %s1429 = scalar_lea.vmem [#allocation5], %s1428
          %1431 = dma.done %s1426, 512
        $region76: #{tpu_custom_call.1} parent=67 // pred_fallthru
          _
      $region68: #{tpu_custom_call.1} parent=5 // pred_fallthru
        _
    $region6: #{tpu_custom_call.1} parent=1 // loop_footer
      %s26 = sadd.s32 1, %s22
    $region7: #{tpu_custom_call.1} parent=1 // loop_footer_branch
      %21 = sbr.rel target = $region3
    $region8: #{tpu_custom_call.1} parent=1 // loop_exit
      _
    %1432 = vsyncpa [#allocation4], 1
    %s1433 = scalar_lea.sflag [#allocation4], 1
    %1434 = vsyncpa %s1433, 1
    %1435 = vsyncpa [#allocation6], 1
    %s1436 = scalar_lea.sflag [#allocation6], 1
    %1437 = vsyncpa %s1436, 1

</llo_original>
